<compile_context>
chip_gen: v5e
topology: v5e:2x2
jax: 0.10.0
libtpu: 0.0.40
codegen_flags: <defaults>
</compile_context>

<pallas_src>
import functools

import numpy as np
import jax
import jax.numpy as jnp
from jax.experimental import pallas as pl
from jax.experimental.pallas import tpu as pltpu


MXU_DTYPE = jnp.bfloat16   # MXU operand dtype; accumulation is always f32.


# ---------------------------------------------------------------------------
# Fused kernel: QKV projection (all heads) -> RoPE -> causal attention ->
# per-head scratch write-back -> output projection.  One grid step = one batch.
# ---------------------------------------------------------------------------
def fused_mha_kernel(x_ref, wqkv_ref, wproj_ref, bproj_ref, cos_ref, sin_ref,
                     o_ref, y_ref, *, num_heads, head_size):
    H, hs = num_heads, head_size
    half = hs // 2
    Hh = H * half            # width of the "real" (and "imag") column group
    D = H * hs               # total head dim
    T = x_ref.shape[0]

    # --- fused q/k/v projection for all heads: ONE MXU matmul (N = 3*H*hs) ----
    # x and the weight slab arrive pre-cast to bf16; f32 accumulation on the MXU.
    qkv = jnp.dot(x_ref[...], wqkv_ref[...],
                  preferred_element_type=jnp.float32)               # (T, 3*D) f32

    qr, qi = qkv[:, :Hh], qkv[:, Hh:D]
    kr, ki = qkv[:, D:D + Hh], qkv[:, D + Hh:2 * D]
    v = qkv[:, 2 * D:]

    # --- RoPE in the global half-split layout ([re | im], head-major) ---------
    # Pure elementwise f32: no lane rotates, concats or relayouts needed.
    cos = cos_ref[...]                                              # (T, Hh)
    sin = sin_ref[...]
    qr_r = qr * cos - qi * sin
    qi_r = qr * sin + qi * cos
    kr_r = kr * cos - ki * sin
    ki_r = kr * sin + ki * cos

    # Single whole-array casts to the MXU dtype, hoisted out of the head loop.
    qr16 = qr_r.astype(MXU_DTYPE)
    qi16 = qi_r.astype(MXU_DTYPE)
    kr16 = kr_r.astype(MXU_DTYPE)
    ki16 = ki_r.astype(MXU_DTYPE)
    v16 = v.astype(MXU_DTYPE)

    # --- causal softmax attention, per head (static unroll over H) ------------
    big_neg = jnp.float32(-1e30)       # finite mask value (NaN-safe)
    row = jax.lax.broadcasted_iota(jnp.int32, (T, T), 0)
    col = jax.lax.broadcasted_iota(jnp.int32, (T, T), 1)
    causal = row >= col

    for h in range(H):
        r = slice(h * half, (h + 1) * half)
        # q_h . k_h  =  (re part) + (im part): two contiguous-slice MXU dots,
        # no lane concatenates.  The 1/sqrt(hs) scale is pre-folded into wq.
        att = (jnp.einsum('td,sd->ts', qr16[:, r], kr16[:, r],
                          preferred_element_type=jnp.float32)
               + jnp.einsum('td,sd->ts', qi16[:, r], ki16[:, r],
                            preferred_element_type=jnp.float32))
        att = jnp.where(causal, att, big_neg)
        att = att - jnp.max(att, axis=-1, keepdims=True)
        p = jnp.exp(att)
        p = p * pl.reciprocal(jnp.sum(p, axis=-1, keepdims=True), approx=True)
        # TODO(synk): attention dropout is identity in eval mode; no RNG applied.
        # Store the head's output straight into the (T, D) VMEM scratch
        # (torch.cat dim=-1 order), bounding live ranges.
        y_ref[:, h * hs:(h + 1) * hs] = jnp.dot(
            p.astype(MXU_DTYPE), v16[:, h * hs:(h + 1) * hs],
            preferred_element_type=jnp.float32)

    # output projection, fused in-kernel; output written lane-dense as (T, C).
    out = jnp.dot(y_ref[...].astype(MXU_DTYPE), wproj_ref[...],
                  preferred_element_type=jnp.float32) + bproj_ref[...]
    # TODO(synk): output dropout is identity in eval mode.
    # TODO(synk): emit bf16 output instead of f32 if the consumer accepts it
    # (halves writeback bytes / vst pressure, esp. on v5e's single vst slot).
    o_ref[...] = out


# ---------------------------------------------------------------------------
# One-time parameter preprocessing (fold into weight loading, NOT per call).
# ---------------------------------------------------------------------------
def prepare_mha_params(wq, wk, wv, w_proj, b_proj, cos, sin):
    H, C, hs = wq.shape
    half = hs // 2
    scale = 1.0 / (hs ** 0.5)

    def half_split(w):   # (H, C, hs) interleaved pairs -> (C, H*hs) = [re | im]
        w_re = jnp.transpose(w[:, :, 0::2], (1, 0, 2)).reshape(C, H * half)
        w_im = jnp.transpose(w[:, :, 1::2], (1, 0, 2)).reshape(C, H * half)
        return jnp.concatenate([w_re, w_im], axis=-1)

    # fold the softmax 1/sqrt(hs) scale into the q columns (RoPE is a rotation,
    # so the scalar commutes with it).
    wq_f = half_split(wq) * scale
    wk_f = half_split(wk)
    # v keeps the original per-head feature order so y matches w_proj's rows.
    wv_f = jnp.transpose(wv, (1, 0, 2)).reshape(C, H * hs)
    # pre-cast the big weight slabs to bf16 (MXU operand dtype).
    w_qkv = jnp.concatenate([wq_f, wk_f, wv_f], axis=-1).astype(MXU_DTYPE)
    w_proj_p = w_proj.astype(MXU_DTYPE)

    cos_t = jnp.tile(cos, (1, H)).astype(jnp.float32)   # (block_size, H*half)
    sin_t = jnp.tile(sin, (1, H)).astype(jnp.float32)
    return w_qkv, w_proj_p, b_proj.astype(jnp.float32), cos_t, sin_t


# ---------------------------------------------------------------------------
# Wrapper
# ---------------------------------------------------------------------------
def multi_head_attention(x, w_qkv, w_proj, b_proj, cos_t, sin_t, *,
                         num_heads, head_size, block_size):
    B, T, C = x.shape
    D = num_heads * head_size
    Hh = num_heads * (head_size // 2)
    assert w_qkv.shape == (C, 3 * D)
    assert T <= block_size   # module buffers (tril / freqs_cis) are block_size long

    # Pre-cast x to the MXU operand dtype outside the kernel (halves x DMA bytes
    # and removes the per-step cast from the vector-ALU slot).
    x16 = x.astype(MXU_DTYPE)

    kernel = functools.partial(fused_mha_kernel,
                               num_heads=num_heads, head_size=head_size)

    # VMEM budget from actual resident buffers (+headroom for intermediates).
    resident = (w_qkv.size * 2 + w_proj.size * 2 + b_proj.size * 4      # weights (bf16/f32)
                + 2 * T * Hh * 4                                        # cos / sin
                + 2 * T * C * 2 + 2 * T * C * 4                         # x, out (double buf)
                + T * D * 4                                             # y scratch
                + T * 3 * D * 4 + 2 * T * T * 4 + 5 * T * D * 4)        # kernel intermediates
    vmem_limit = int(min(max(2 * resident, 32 << 20), 64 << 20))

    flops = (2 * B * T * C * 3 * D                     # fused qkv projection
             + 4 * B * num_heads * T * T * head_size   # scores + att @ v
             + 2 * B * T * D * C)                      # output projection
    bytes_accessed = (2 * (x.size + w_qkv.size + w_proj.size)           # bf16
                      + 4 * (b_proj.size + 2 * T * Hh + B * T * C))     # f32

    def call(single_buffer_weights):
        # Grid-invariant inputs: constant index_map; single-buffer them to halve
        # their VMEM residency (they are never re-fetched across grid steps).
        wkw = (dict(pipeline_mode=pl.Buffered(buffer_count=1))
               if single_buffer_weights else {})
        in_specs = [
            pl.BlockSpec((pl.Squeezed(), T, C), lambda b: (b, 0, 0)),   # x
            pl.BlockSpec((C, 3 * D), lambda b: (0, 0), **wkw),          # fused qkv W (bf16)
            pl.BlockSpec((D, C), lambda b: (0, 0), **wkw),              # proj W (bf16)
            pl.BlockSpec((1, C), lambda b: (0, 0), **wkw),              # proj bias
            pl.BlockSpec((T, Hh), lambda b: (0, 0), **wkw),             # cos rows [:T]
            pl.BlockSpec((T, Hh), lambda b: (0, 0), **wkw),             # sin rows [:T]
        ]
        return pl.pallas_call(
            kernel,
            out_shape=jax.ShapeDtypeStruct((B, T, C), jnp.float32),
            grid=(B,),
            in_specs=in_specs,
            out_specs=pl.BlockSpec((pl.Squeezed(), T, C), lambda b: (b, 0, 0)),
            scratch_shapes=[pltpu.VMEM((T, D), jnp.float32)],           # y (head concat)
            compiler_params=pltpu.CompilerParams(
                dimension_semantics=("parallel",),                      # megacore on v7x
                vmem_limit_bytes=vmem_limit),
            cost_estimate=pl.CostEstimate(
                flops=int(flops),
                transcendentals=int(B * num_heads * T * T),
                bytes_accessed=int(bytes_accessed)),
        )(x16, w_qkv, w_proj, b_proj, cos_t, sin_t)

    try:
        return jax.block_until_ready(call(True))
    except Exception:
        # TODO(synk): pl.Buffered(1) single-buffering rejected by this jax/Mosaic
        # version; fall back to default double-buffered grid-invariant inputs.
        return jax.block_until_ready(call(False))


# ---------------------------------------------------------------------------
# Pure-JAX reference (mirrors the PyTorch code, interleaved complex RoPE)
# ---------------------------------------------------------------------------
def reference_mha(x, wq, wk, wv, w_proj, b_proj, freqs_cis):
    B, T, C = x.shape
    H, _, hs = wq.shape
    fc = freqs_cis[:T]  # (T, hs//2) complex

    def rope(t):  # (B, T, hs)
        tc = t.reshape(B, T, hs // 2, 2)
        tc = tc[..., 0] + 1j * tc[..., 1]
        tr = tc * fc[None]
        return jnp.stack([jnp.real(tr), jnp.imag(tr)], axis=-1).reshape(B, T, hs)

    outs = []
    mask = jnp.tril(jnp.ones((T, T), dtype=bool))
    for h in range(H):
        q = rope(x @ wq[h])
        k = rope(x @ wk[h])
        v = x @ wv[h]
        att = jnp.einsum("btd,bsd->bts", q, k) / (hs ** 0.5)
        att = jnp.where(mask[None], att, -jnp.inf)
        att = jax.nn.softmax(att, axis=-1)
        outs.append(jnp.einsum("bts,bsd->btd", att, v))
    y = jnp.concatenate(outs, axis=-1)
    return y @ w_proj + b_proj


# ---------------------------------------------------------------------------
if __name__ == "__main__":
    # module hyper-params (small, deterministic)
    B, T = 2, 8
    n_embd = 32
    num_heads = 4
    head_size = 8
    block_size = 16
    theta = 10000.0

    key = jax.random.PRNGKey(0)
    k_x, k_q, k_k, k_v, k_p, k_b = jax.random.split(key, 6)

    x = jax.random.normal(k_x, (B, T, n_embd), dtype=jnp.float32)
    wq = 0.05 * jax.random.normal(k_q, (num_heads, n_embd, head_size), jnp.float32)
    wk = 0.05 * jax.random.normal(k_k, (num_heads, n_embd, head_size), jnp.float32)
    wv = 0.05 * jax.random.normal(k_v, (num_heads, n_embd, head_size), jnp.float32)
    w_proj = 0.05 * jax.random.normal(k_p, (num_heads * head_size, n_embd), jnp.float32)
    b_proj = 0.05 * jax.random.normal(k_b, (1, n_embd), jnp.float32)

    # precompute_freqs_cis(head_size, block_size)
    freqs = 1.0 / theta ** (np.arange(0, head_size, 2)[: head_size // 2] / head_size)
    angles = np.outer(np.arange(block_size), freqs)          # (block_size, hs//2)
    cos = jnp.asarray(np.cos(angles), dtype=jnp.float32)
    sin = jnp.asarray(np.sin(angles), dtype=jnp.float32)
    freqs_cis = jnp.asarray(np.exp(1j * angles))

    # one-time parameter preprocessing (layout permutation, scale fold, bf16 cast)
    w_qkv, w_proj_p, b_proj_p, cos_t, sin_t = prepare_mha_params(
        wq, wk, wv, w_proj, b_proj, cos, sin)

    out = multi_head_attention(x, w_qkv, w_proj_p, b_proj_p, cos_t, sin_t,
                               num_heads=num_heads, head_size=head_size,
                               block_size=block_size)
    out = jax.block_until_ready(out)

    ref = reference_mha(x, wq, wk, wv, w_proj, b_proj, freqs_cis)
    # tolerance reflects bf16 MXU operands + approx EUP reciprocal (f32 reference).
    np.testing.assert_allclose(np.asarray(out), np.asarray(ref),
                               rtol=2e-2, atol=5e-3)

    print("KERNEL_OK")
</pallas_src>

<mosaic_0001>
module attributes {stable_mosaic.version = 11 : i64} {
  func.func @fused_mha_kernel(%arg0: i32, %arg1: memref<1x8x32xbf16, #tpu.memory_space<vmem>>, %arg2: memref<32x96xbf16, #tpu.memory_space<vmem>>, %arg3: memref<32x32xbf16, #tpu.memory_space<vmem>>, %arg4: memref<1x32xf32, #tpu.memory_space<vmem>>, %arg5: memref<8x16xf32, #tpu.memory_space<vmem>>, %arg6: memref<8x16xf32, #tpu.memory_space<vmem>>, %arg7: memref<1x8x32xf32, #tpu.memory_space<vmem>>, %arg8: memref<8x32xf32, #tpu.memory_space<vmem>>) attributes {dimension_semantics = [#tpu.dimension_semantics<parallel>], iteration_bounds = array<i64: 2>, scalar_prefetch = 0 : i64, scratch_operands = 1 : i64, tpu.core_type = #tpu.core_type<tc>, window_params = [{transform_indices = @transform_0, window_bounds = array<i64: 1, 8, 32>}, {pipeline_mode = #tpu.pipeline_mode<synchronous>, transform_indices = @transform_1, window_bounds = array<i64: 32, 96>}, {pipeline_mode = #tpu.pipeline_mode<synchronous>, transform_indices = @transform_2, window_bounds = array<i64: 32, 32>}, {pipeline_mode = #tpu.pipeline_mode<synchronous>, transform_indices = @transform_3, window_bounds = array<i64: 1, 32>}, {pipeline_mode = #tpu.pipeline_mode<synchronous>, transform_indices = @transform_4, window_bounds = array<i64: 8, 16>}, {pipeline_mode = #tpu.pipeline_mode<synchronous>, transform_indices = @transform_5, window_bounds = array<i64: 8, 16>}, {transform_indices = @transform_6, window_bounds = array<i64: 1, 8, 32>}]} {
    %c0 = arith.constant 0 : index
    %c0_0 = arith.constant 0 : index
    %c0_1 = arith.constant 0 : index
    %0 = vector.load %arg1[%c0, %c0_0, %c0_1] : memref<1x8x32xbf16, #tpu.memory_space<vmem>>, vector<1x8x32xbf16>
    %1 = vector.shape_cast %0 : vector<1x8x32xbf16> to vector<8x32xbf16>
    %c0_2 = arith.constant 0 : index
    %c0_3 = arith.constant 0 : index
    %2 = vector.load %arg2[%c0_2, %c0_3] : memref<32x96xbf16, #tpu.memory_space<vmem>>, vector<32x96xbf16>
    %cst = arith.constant dense<0.000000e+00> : vector<8x96xf32>
    %3 = tpu.matmul %1, %2, %cst {dimension_numbers = #tpu.dot_dimension_numbers<[1], [0], [0], [1], [0, 0, 1, 1], [], []>} : vector<8x32xbf16>, vector<32x96xbf16>, vector<8x96xf32> -> vector<8x96xf32>
    %4 = vector.extract_strided_slice %3 {offsets = [0, 0], sizes = [8, 16], strides = [1, 1]} : vector<8x96xf32> to vector<8x16xf32>
    %5 = vector.extract_strided_slice %3 {offsets = [0, 16], sizes = [8, 16], strides = [1, 1]} : vector<8x96xf32> to vector<8x16xf32>
    %6 = vector.extract_strided_slice %3 {offsets = [0, 32], sizes = [8, 16], strides = [1, 1]} : vector<8x96xf32> to vector<8x16xf32>
    %7 = vector.extract_strided_slice %3 {offsets = [0, 48], sizes = [8, 16], strides = [1, 1]} : vector<8x96xf32> to vector<8x16xf32>
    %8 = vector.extract_strided_slice %3 {offsets = [0, 64], sizes = [8, 32], strides = [1, 1]} : vector<8x96xf32> to vector<8x32xf32>
    %c0_4 = arith.constant 0 : index
    %c0_5 = arith.constant 0 : index
    %9 = vector.load %arg5[%c0_4, %c0_5] : memref<8x16xf32, #tpu.memory_space<vmem>>, vector<8x16xf32>
    %c0_6 = arith.constant 0 : index
    %c0_7 = arith.constant 0 : index
    %10 = vector.load %arg6[%c0_6, %c0_7] : memref<8x16xf32, #tpu.memory_space<vmem>>, vector<8x16xf32>
    %11 = arith.mulf %4, %9 : vector<8x16xf32>
    %12 = arith.mulf %5, %10 : vector<8x16xf32>
    %13 = arith.subf %11, %12 : vector<8x16xf32>
    %14 = arith.mulf %4, %10 : vector<8x16xf32>
    %15 = arith.mulf %5, %9 : vector<8x16xf32>
    %16 = arith.addf %14, %15 : vector<8x16xf32>
    %17 = arith.mulf %6, %9 : vector<8x16xf32>
    %18 = arith.mulf %7, %10 : vector<8x16xf32>
    %19 = arith.subf %17, %18 : vector<8x16xf32>
    %20 = arith.mulf %6, %10 : vector<8x16xf32>
    %21 = arith.mulf %7, %9 : vector<8x16xf32>
    %22 = arith.addf %20, %21 : vector<8x16xf32>
    %23 = arith.truncf %13 : vector<8x16xf32> to vector<8x16xbf16>
    %24 = arith.truncf %16 : vector<8x16xf32> to vector<8x16xbf16>
    %25 = arith.truncf %19 : vector<8x16xf32> to vector<8x16xbf16>
    %26 = arith.truncf %22 : vector<8x16xf32> to vector<8x16xbf16>
    %27 = arith.truncf %8 : vector<8x32xf32> to vector<8x32xbf16>
    %28 = tpu.iota {dimensions = array<i32: 0>} : vector<8x8xi32>
    %29 = tpu.iota {dimensions = array<i32: 1>} : vector<8x8xi32>
    %30 = arith.cmpi sge, %28, %29 : vector<8x8xi32>
    %31 = vector.extract_strided_slice %23 {offsets = [0, 0], sizes = [8, 4], strides = [1, 1]} : vector<8x16xbf16> to vector<8x4xbf16>
    %32 = vector.extract_strided_slice %25 {offsets = [0, 0], sizes = [8, 4], strides = [1, 1]} : vector<8x16xbf16> to vector<8x4xbf16>
    "tpu.trace_start"() <{level = 10 : i32, message = "td,sd->ts"}> : () -> ()
    %cst_8 = arith.constant dense<0.000000e+00> : vector<8x8xf32>
    %33 = tpu.matmul %31, %32, %cst_8 {dimension_numbers = #tpu.dot_dimension_numbers<[1], [1], [0], [0], [0, 0, 1, 0], [], []>} : vector<8x4xbf16>, vector<8x4xbf16>, vector<8x8xf32> -> vector<8x8xf32>
    "tpu.trace_stop"() : () -> ()
    %34 = vector.extract_strided_slice %24 {offsets = [0, 0], sizes = [8, 4], strides = [1, 1]} : vector<8x16xbf16> to vector<8x4xbf16>
    %35 = vector.extract_strided_slice %26 {offsets = [0, 0], sizes = [8, 4], strides = [1, 1]} : vector<8x16xbf16> to vector<8x4xbf16>
    "tpu.trace_start"() <{level = 10 : i32, message = "td,sd->ts"}> : () -> ()
    %cst_9 = arith.constant dense<0.000000e+00> : vector<8x8xf32>
    %36 = tpu.matmul %34, %35, %cst_9 {dimension_numbers = #tpu.dot_dimension_numbers<[1], [1], [0], [0], [0, 0, 1, 0], [], []>} : vector<8x4xbf16>, vector<8x4xbf16>, vector<8x8xf32> -> vector<8x8xf32>
    "tpu.trace_stop"() : () -> ()
    %37 = arith.addf %33, %36 : vector<8x8xf32>
    %cst_10 = arith.constant -1.000000e+30 : f32
    %38 = vector.broadcast %cst_10 : f32 to vector<8x8xf32>
    %39 = arith.select %30, %37, %38 : vector<8x8xi1>, vector<8x8xf32>
    %cst_11 = arith.constant dense<0xFF800000> : vector<8xf32>
    %40 = vector.multi_reduction <maximumf>, %39, %cst_11 [1] : vector<8x8xf32> to vector<8xf32>
    %41 = vector.shape_cast %40 : vector<8xf32> to vector<8x1xf32>
    %42 = vector.broadcast %41 : vector<8x1xf32> to vector<8x8xf32>
    %43 = arith.subf %39, %42 : vector<8x8xf32>
    %44 = math.exp %43 : vector<8x8xf32>
    %cst_12 = arith.constant dense<0.000000e+00> : vector<8xf32>
    %45 = vector.multi_reduction <add>, %44, %cst_12 [1] : vector<8x8xf32> to vector<8xf32>
    %46 = vector.shape_cast %45 : vector<8xf32> to vector<8x1xf32>
    %47 = tpu.reciprocal %46 {approx = true} : vector<8x1xf32> -> vector<8x1xf32>
    %48 = vector.broadcast %47 : vector<8x1xf32> to vector<8x8xf32>
    %49 = arith.mulf %44, %48 : vector<8x8xf32>
    %50 = arith.truncf %49 : vector<8x8xf32> to vector<8x8xbf16>
    %51 = vector.extract_strided_slice %27 {offsets = [0, 0], sizes = [8, 8], strides = [1, 1]} : vector<8x32xbf16> to vector<8x8xbf16>
    %cst_13 = arith.constant dense<0.000000e+00> : vector<8x8xf32>
    %52 = tpu.matmul %50, %51, %cst_13 {dimension_numbers = #tpu.dot_dimension_numbers<[1], [0], [0], [1], [0, 0, 1, 1], [], []>} : vector<8x8xbf16>, vector<8x8xbf16>, vector<8x8xf32> -> vector<8x8xf32>
    %c0_14 = arith.constant 0 : index
    %c0_15 = arith.constant 0 : index
    %53 = vector.load %arg8[%c0_14, %c0_15] : memref<8x32xf32, #tpu.memory_space<vmem>>, vector<8x8xf32>
    tpu.vector_store %arg8[%c0_14, %c0_15], %52 {strides = array<i32>} : memref<8x32xf32, #tpu.memory_space<vmem>>, vector<8x8xf32>,
    %54 = vector.extract_strided_slice %23 {offsets = [0, 4], sizes = [8, 4], strides = [1, 1]} : vector<8x16xbf16> to vector<8x4xbf16>
    %55 = vector.extract_strided_slice %25 {offsets = [0, 4], sizes = [8, 4], strides = [1, 1]} : vector<8x16xbf16> to vector<8x4xbf16>
    "tpu.trace_start"() <{level = 10 : i32, message = "td,sd->ts"}> : () -> ()
    %cst_16 = arith.constant dense<0.000000e+00> : vector<8x8xf32>
    %56 = tpu.matmul %54, %55, %cst_16 {dimension_numbers = #tpu.dot_dimension_numbers<[1], [1], [0], [0], [0, 0, 1, 0], [], []>} : vector<8x4xbf16>, vector<8x4xbf16>, vector<8x8xf32> -> vector<8x8xf32>
    "tpu.trace_stop"() : () -> ()
    %57 = vector.extract_strided_slice %24 {offsets = [0, 4], sizes = [8, 4], strides = [1, 1]} : vector<8x16xbf16> to vector<8x4xbf16>
    %58 = vector.extract_strided_slice %26 {offsets = [0, 4], sizes = [8, 4], strides = [1, 1]} : vector<8x16xbf16> to vector<8x4xbf16>
    "tpu.trace_start"() <{level = 10 : i32, message = "td,sd->ts"}> : () -> ()
    %cst_17 = arith.constant dense<0.000000e+00> : vector<8x8xf32>
    %59 = tpu.matmul %57, %58, %cst_17 {dimension_numbers = #tpu.dot_dimension_numbers<[1], [1], [0], [0], [0, 0, 1, 0], [], []>} : vector<8x4xbf16>, vector<8x4xbf16>, vector<8x8xf32> -> vector<8x8xf32>
    "tpu.trace_stop"() : () -> ()
    %60 = arith.addf %56, %59 : vector<8x8xf32>
    %cst_18 = arith.constant -1.000000e+30 : f32
    %61 = vector.broadcast %cst_18 : f32 to vector<8x8xf32>
    %62 = arith.select %30, %60, %61 : vector<8x8xi1>, vector<8x8xf32>
    %cst_19 = arith.constant dense<0xFF800000> : vector<8xf32>
    %63 = vector.multi_reduction <maximumf>, %62, %cst_19 [1] : vector<8x8xf32> to vector<8xf32>
    %64 = vector.shape_cast %63 : vector<8xf32> to vector<8x1xf32>
    %65 = vector.broadcast %64 : vector<8x1xf32> to vector<8x8xf32>
    %66 = arith.subf %62, %65 : vector<8x8xf32>
    %67 = math.exp %66 : vector<8x8xf32>
    %cst_20 = arith.constant dense<0.000000e+00> : vector<8xf32>
    %68 = vector.multi_reduction <add>, %67, %cst_20 [1] : vector<8x8xf32> to vector<8xf32>
    %69 = vector.shape_cast %68 : vector<8xf32> to vector<8x1xf32>
    %70 = tpu.reciprocal %69 {approx = true} : vector<8x1xf32> -> vector<8x1xf32>
    %71 = vector.broadcast %70 : vector<8x1xf32> to vector<8x8xf32>
    %72 = arith.mulf %67, %71 : vector<8x8xf32>
    %73 = arith.truncf %72 : vector<8x8xf32> to vector<8x8xbf16>
    %74 = vector.extract_strided_slice %27 {offsets = [0, 8], sizes = [8, 8], strides = [1, 1]} : vector<8x32xbf16> to vector<8x8xbf16>
    %cst_21 = arith.constant dense<0.000000e+00> : vector<8x8xf32>
    %75 = tpu.matmul %73, %74, %cst_21 {dimension_numbers = #tpu.dot_dimension_numbers<[1], [0], [0], [1], [0, 0, 1, 1], [], []>} : vector<8x8xbf16>, vector<8x8xbf16>, vector<8x8xf32> -> vector<8x8xf32>
    %c0_22 = arith.constant 0 : index
    %c8 = arith.constant 8 : index
    %76 = vector.load %arg8[%c0_22, %c8] : memref<8x32xf32, #tpu.memory_space<vmem>>, vector<8x8xf32>
    tpu.vector_store %arg8[%c0_22, %c8], %75 {strides = array<i32>} : memref<8x32xf32, #tpu.memory_space<vmem>>, vector<8x8xf32>,
    %77 = vector.extract_strided_slice %23 {offsets = [0, 8], sizes = [8, 4], strides = [1, 1]} : vector<8x16xbf16> to vector<8x4xbf16>
    %78 = vector.extract_strided_slice %25 {offsets = [0, 8], sizes = [8, 4], strides = [1, 1]} : vector<8x16xbf16> to vector<8x4xbf16>
    "tpu.trace_start"() <{level = 10 : i32, message = "td,sd->ts"}> : () -> ()
    %cst_23 = arith.constant dense<0.000000e+00> : vector<8x8xf32>
    %79 = tpu.matmul %77, %78, %cst_23 {dimension_numbers = #tpu.dot_dimension_numbers<[1], [1], [0], [0], [0, 0, 1, 0], [], []>} : vector<8x4xbf16>, vector<8x4xbf16>, vector<8x8xf32> -> vector<8x8xf32>
    "tpu.trace_stop"() : () -> ()
    %80 = vector.extract_strided_slice %24 {offsets = [0, 8], sizes = [8, 4], strides = [1, 1]} : vector<8x16xbf16> to vector<8x4xbf16>
    %81 = vector.extract_strided_slice %26 {offsets = [0, 8], sizes = [8, 4], strides = [1, 1]} : vector<8x16xbf16> to vector<8x4xbf16>
    "tpu.trace_start"() <{level = 10 : i32, message = "td,sd->ts"}> : () -> ()
    %cst_24 = arith.constant dense<0.000000e+00> : vector<8x8xf32>
    %82 = tpu.matmul %80, %81, %cst_24 {dimension_numbers = #tpu.dot_dimension_numbers<[1], [1], [0], [0], [0, 0, 1, 0], [], []>} : vector<8x4xbf16>, vector<8x4xbf16>, vector<8x8xf32> -> vector<8x8xf32>
    "tpu.trace_stop"() : () -> ()
    %83 = arith.addf %79, %82 : vector<8x8xf32>
    %cst_25 = arith.constant -1.000000e+30 : f32
    %84 = vector.broadcast %cst_25 : f32 to vector<8x8xf32>
    %85 = arith.select %30, %83, %84 : vector<8x8xi1>, vector<8x8xf32>
    %cst_26 = arith.constant dense<0xFF800000> : vector<8xf32>
    %86 = vector.multi_reduction <maximumf>, %85, %cst_26 [1] : vector<8x8xf32> to vector<8xf32>
    %87 = vector.shape_cast %86 : vector<8xf32> to vector<8x1xf32>
    %88 = vector.broadcast %87 : vector<8x1xf32> to vector<8x8xf32>
    %89 = arith.subf %85, %88 : vector<8x8xf32>
    %90 = math.exp %89 : vector<8x8xf32>
    %cst_27 = arith.constant dense<0.000000e+00> : vector<8xf32>
    %91 = vector.multi_reduction <add>, %90, %cst_27 [1] : vector<8x8xf32> to vector<8xf32>
    %92 = vector.shape_cast %91 : vector<8xf32> to vector<8x1xf32>
    %93 = tpu.reciprocal %92 {approx = true} : vector<8x1xf32> -> vector<8x1xf32>
    %94 = vector.broadcast %93 : vector<8x1xf32> to vector<8x8xf32>
    %95 = arith.mulf %90, %94 : vector<8x8xf32>
    %96 = arith.truncf %95 : vector<8x8xf32> to vector<8x8xbf16>
    %97 = vector.extract_strided_slice %27 {offsets = [0, 16], sizes = [8, 8], strides = [1, 1]} : vector<8x32xbf16> to vector<8x8xbf16>
    %cst_28 = arith.constant dense<0.000000e+00> : vector<8x8xf32>
    %98 = tpu.matmul %96, %97, %cst_28 {dimension_numbers = #tpu.dot_dimension_numbers<[1], [0], [0], [1], [0, 0, 1, 1], [], []>} : vector<8x8xbf16>, vector<8x8xbf16>, vector<8x8xf32> -> vector<8x8xf32>
    %c0_29 = arith.constant 0 : index
    %c16 = arith.constant 16 : index
    %99 = vector.load %arg8[%c0_29, %c16] : memref<8x32xf32, #tpu.memory_space<vmem>>, vector<8x8xf32>
    tpu.vector_store %arg8[%c0_29, %c16], %98 {strides = array<i32>} : memref<8x32xf32, #tpu.memory_space<vmem>>, vector<8x8xf32>,
    %100 = vector.extract_strided_slice %23 {offsets = [0, 12], sizes = [8, 4], strides = [1, 1]} : vector<8x16xbf16> to vector<8x4xbf16>
    %101 = vector.extract_strided_slice %25 {offsets = [0, 12], sizes = [8, 4], strides = [1, 1]} : vector<8x16xbf16> to vector<8x4xbf16>
    "tpu.trace_start"() <{level = 10 : i32, message = "td,sd->ts"}> : () -> ()
    %cst_30 = arith.constant dense<0.000000e+00> : vector<8x8xf32>
    %102 = tpu.matmul %100, %101, %cst_30 {dimension_numbers = #tpu.dot_dimension_numbers<[1], [1], [0], [0], [0, 0, 1, 0], [], []>} : vector<8x4xbf16>, vector<8x4xbf16>, vector<8x8xf32> -> vector<8x8xf32>
    "tpu.trace_stop"() : () -> ()
    %103 = vector.extract_strided_slice %24 {offsets = [0, 12], sizes = [8, 4], strides = [1, 1]} : vector<8x16xbf16> to vector<8x4xbf16>
    %104 = vector.extract_strided_slice %26 {offsets = [0, 12], sizes = [8, 4], strides = [1, 1]} : vector<8x16xbf16> to vector<8x4xbf16>
    "tpu.trace_start"() <{level = 10 : i32, message = "td,sd->ts"}> : () -> ()
    %cst_31 = arith.constant dense<0.000000e+00> : vector<8x8xf32>
    %105 = tpu.matmul %103, %104, %cst_31 {dimension_numbers = #tpu.dot_dimension_numbers<[1], [1], [0], [0], [0, 0, 1, 0], [], []>} : vector<8x4xbf16>, vector<8x4xbf16>, vector<8x8xf32> -> vector<8x8xf32>
    "tpu.trace_stop"() : () -> ()
    %106 = arith.addf %102, %105 : vector<8x8xf32>
    %cst_32 = arith.constant -1.000000e+30 : f32
    %107 = vector.broadcast %cst_32 : f32 to vector<8x8xf32>
    %108 = arith.select %30, %106, %107 : vector<8x8xi1>, vector<8x8xf32>
    %cst_33 = arith.constant dense<0xFF800000> : vector<8xf32>
    %109 = vector.multi_reduction <maximumf>, %108, %cst_33 [1] : vector<8x8xf32> to vector<8xf32>
    %110 = vector.shape_cast %109 : vector<8xf32> to vector<8x1xf32>
    %111 = vector.broadcast %110 : vector<8x1xf32> to vector<8x8xf32>
    %112 = arith.subf %108, %111 : vector<8x8xf32>
    %113 = math.exp %112 : vector<8x8xf32>
    %cst_34 = arith.constant dense<0.000000e+00> : vector<8xf32>
    %114 = vector.multi_reduction <add>, %113, %cst_34 [1] : vector<8x8xf32> to vector<8xf32>
    %115 = vector.shape_cast %114 : vector<8xf32> to vector<8x1xf32>
    %116 = tpu.reciprocal %115 {approx = true} : vector<8x1xf32> -> vector<8x1xf32>
    %117 = vector.broadcast %116 : vector<8x1xf32> to vector<8x8xf32>
    %118 = arith.mulf %113, %117 : vector<8x8xf32>
    %119 = arith.truncf %118 : vector<8x8xf32> to vector<8x8xbf16>
    %120 = vector.extract_strided_slice %27 {offsets = [0, 24], sizes = [8, 8], strides = [1, 1]} : vector<8x32xbf16> to vector<8x8xbf16>
    %cst_35 = arith.constant dense<0.000000e+00> : vector<8x8xf32>
    %121 = tpu.matmul %119, %120, %cst_35 {dimension_numbers = #tpu.dot_dimension_numbers<[1], [0], [0], [1], [0, 0, 1, 1], [], []>} : vector<8x8xbf16>, vector<8x8xbf16>, vector<8x8xf32> -> vector<8x8xf32>
    %c0_36 = arith.constant 0 : index
    %c24 = arith.constant 24 : index
    %122 = vector.load %arg8[%c0_36, %c24] : memref<8x32xf32, #tpu.memory_space<vmem>>, vector<8x8xf32>
    tpu.vector_store %arg8[%c0_36, %c24], %121 {strides = array<i32>} : memref<8x32xf32, #tpu.memory_space<vmem>>, vector<8x8xf32>,
    %c0_37 = arith.constant 0 : index
    %c0_38 = arith.constant 0 : index
    %123 = vector.load %arg8[%c0_37, %c0_38] : memref<8x32xf32, #tpu.memory_space<vmem>>, vector<8x32xf32>
    %124 = arith.truncf %123 : vector<8x32xf32> to vector<8x32xbf16>
    %c0_39 = arith.constant 0 : index
    %c0_40 = arith.constant 0 : index
    %125 = vector.load %arg3[%c0_39, %c0_40] : memref<32x32xbf16, #tpu.memory_space<vmem>>, vector<32x32xbf16>
    %cst_41 = arith.constant dense<0.000000e+00> : vector<8x32xf32>
    %126 = tpu.matmul %124, %125, %cst_41 {dimension_numbers = #tpu.dot_dimension_numbers<[1], [0], [0], [1], [0, 0, 1, 1], [], []>} : vector<8x32xbf16>, vector<32x32xbf16>, vector<8x32xf32> -> vector<8x32xf32>
    %c0_42 = arith.constant 0 : index
    %c0_43 = arith.constant 0 : index
    %127 = vector.load %arg4[%c0_42, %c0_43] : memref<1x32xf32, #tpu.memory_space<vmem>>, vector<1x32xf32>
    %128 = vector.broadcast %127 : vector<1x32xf32> to vector<8x32xf32>
    %129 = arith.addf %126, %128 : vector<8x32xf32>
    %c0_44 = arith.constant 0 : index
    %c0_45 = arith.constant 0 : index
    %c0_46 = arith.constant 0 : index
    %130 = vector.load %arg7[%c0_44, %c0_45, %c0_46] : memref<1x8x32xf32, #tpu.memory_space<vmem>>, vector<1x8x32xf32>
    %131 = vector.shape_cast %130 : vector<1x8x32xf32> to vector<8x32xf32>
    %132 = vector.shape_cast %129 : vector<8x32xf32> to vector<1x8x32xf32>
    tpu.vector_store %arg7[%c0_44, %c0_45, %c0_46], %132 {strides = array<i32>} : memref<1x8x32xf32, #tpu.memory_space<vmem>>, vector<1x8x32xf32>,
    return
  }
  func.func @transform_0(%arg0: i32) -> (i32, i32, i32) {
    %c0_i32 = arith.constant 0 : i32
    %c0_i32_0 = arith.constant 0 : i32
    %c0_i32_1 = arith.constant 0 : i32
    return %arg0, %c0_i32, %c0_i32_0 : i32, i32, i32
  }
  func.func @transform_1(%arg0: i32) -> (i32, i32) {
    %c0_i32 = arith.constant 0 : i32
    %c0_i32_0 = arith.constant 0 : i32
    %c0_i32_1 = arith.constant 0 : i32
    return %c0_i32, %c0_i32_0 : i32, i32
  }
  func.func @transform_2(%arg0: i32) -> (i32, i32) {
    %c0_i32 = arith.constant 0 : i32
    %c0_i32_0 = arith.constant 0 : i32
    %c0_i32_1 = arith.constant 0 : i32
    return %c0_i32, %c0_i32_0 : i32, i32
  }
  func.func @transform_3(%arg0: i32) -> (i32, i32) {
    %c0_i32 = arith.constant 0 : i32
    %c0_i32_0 = arith.constant 0 : i32
    %c0_i32_1 = arith.constant 0 : i32
    return %c0_i32, %c0_i32_0 : i32, i32
  }
  func.func @transform_4(%arg0: i32) -> (i32, i32) {
    %c0_i32 = arith.constant 0 : i32
    %c0_i32_0 = arith.constant 0 : i32
    %c0_i32_1 = arith.constant 0 : i32
    return %c0_i32, %c0_i32_0 : i32, i32
  }
  func.func @transform_5(%arg0: i32) -> (i32, i32) {
    %c0_i32 = arith.constant 0 : i32
    %c0_i32_0 = arith.constant 0 : i32
    %c0_i32_1 = arith.constant 0 : i32
    return %c0_i32, %c0_i32_0 : i32, i32
  }
  func.func @transform_6(%arg0: i32) -> (i32, i32, i32) {
    %c0_i32 = arith.constant 0 : i32
    %c0_i32_0 = arith.constant 0 : i32
    %c0_i32_1 = arith.constant 0 : i32
    return %arg0, %c0_i32, %c0_i32_0 : i32, i32, i32
  }
}

module attributes {stable_mosaic.version = 11 : i64} {
  func.func @fused_mha_kernel(%arg0: i32, %arg1: memref<1x8x32xbf16, #tpu.memory_space<vmem>>, %arg2: memref<32x96xbf16, #tpu.memory_space<vmem>>, %arg3: memref<32x32xbf16, #tpu.memory_space<vmem>>, %arg4: memref<1x32xf32, #tpu.memory_space<vmem>>, %arg5: memref<8x16xf32, #tpu.memory_space<vmem>>, %arg6: memref<8x16xf32, #tpu.memory_space<vmem>>, %arg7: memref<1x8x32xf32, #tpu.memory_space<vmem>>, %arg8: memref<8x32xf32, #tpu.memory_space<vmem>>) attributes {dimension_semantics = [#tpu.dimension_semantics<parallel>], iteration_bounds = array<i64: 2>, scalar_prefetch = 0 : i64, scratch_operands = 1 : i64, tpu.core_type = #tpu.core_type<tc>, window_params = [{transform_indices = @transform_0, window_bounds = array<i64: 1, 8, 32>}, {pipeline_mode = #tpu.pipeline_mode<synchronous>, transform_indices = @transform_1, window_bounds = array<i64: 32, 96>}, {pipeline_mode = #tpu.pipeline_mode<synchronous>, transform_indices = @transform_2, window_bounds = array<i64: 32, 32>}, {pipeline_mode = #tpu.pipeline_mode<synchronous>, transform_indices = @transform_3, window_bounds = array<i64: 1, 32>}, {transform_indices = @transform_4, window_bounds = array<i64: 8, 16>}, {transform_indices = @transform_5, window_bounds = array<i64: 8, 16>}, {transform_indices = @transform_6, window_bounds = array<i64: 1, 8, 32>}]} {
    %c0 = arith.constant 0 : index
    %c0_0 = arith.constant 0 : index
    %c0_1 = arith.constant 0 : index
    %0 = vector.load %arg1[%c0, %c0_0, %c0_1] : memref<1x8x32xbf16, #tpu.memory_space<vmem>>, vector<1x8x32xbf16>
    %1 = vector.shape_cast %0 : vector<1x8x32xbf16> to vector<8x32xbf16>
    %c0_2 = arith.constant 0 : index
    %c0_3 = arith.constant 0 : index
    %2 = vector.load %arg2[%c0_2, %c0_3] : memref<32x96xbf16, #tpu.memory_space<vmem>>, vector<32x96xbf16>
    %cst = arith.constant dense<0.000000e+00> : vector<8x96xf32>
    %3 = tpu.matmul %1, %2, %cst {dimension_numbers = #tpu.dot_dimension_numbers<[1], [0], [0], [1], [0, 0, 1, 1], [], []>} : vector<8x32xbf16>, vector<32x96xbf16>, vector<8x96xf32> -> vector<8x96xf32>
    %4 = vector.extract_strided_slice %3 {offsets = [0, 0], sizes = [8, 16], strides = [1, 1]} : vector<8x96xf32> to vector<8x16xf32>
    %5 = vector.extract_strided_slice %3 {offsets = [0, 16], sizes = [8, 16], strides = [1, 1]} : vector<8x96xf32> to vector<8x16xf32>
    %6 = vector.extract_strided_slice %3 {offsets = [0, 32], sizes = [8, 16], strides = [1, 1]} : vector<8x96xf32> to vector<8x16xf32>
    %7 = vector.extract_strided_slice %3 {offsets = [0, 48], sizes = [8, 16], strides = [1, 1]} : vector<8x96xf32> to vector<8x16xf32>
    %8 = vector.extract_strided_slice %3 {offsets = [0, 64], sizes = [8, 32], strides = [1, 1]} : vector<8x96xf32> to vector<8x32xf32>
    %c0_4 = arith.constant 0 : index
    %c0_5 = arith.constant 0 : index
    %9 = vector.load %arg5[%c0_4, %c0_5] : memref<8x16xf32, #tpu.memory_space<vmem>>, vector<8x16xf32>
    %c0_6 = arith.constant 0 : index
    %c0_7 = arith.constant 0 : index
    %10 = vector.load %arg6[%c0_6, %c0_7] : memref<8x16xf32, #tpu.memory_space<vmem>>, vector<8x16xf32>
    %11 = arith.mulf %4, %9 : vector<8x16xf32>
    %12 = arith.mulf %5, %10 : vector<8x16xf32>
    %13 = arith.subf %11, %12 : vector<8x16xf32>
    %14 = arith.mulf %4, %10 : vector<8x16xf32>
    %15 = arith.mulf %5, %9 : vector<8x16xf32>
    %16 = arith.addf %14, %15 : vector<8x16xf32>
    %17 = arith.mulf %6, %9 : vector<8x16xf32>
    %18 = arith.mulf %7, %10 : vector<8x16xf32>
    %19 = arith.subf %17, %18 : vector<8x16xf32>
    %20 = arith.mulf %6, %10 : vector<8x16xf32>
    %21 = arith.mulf %7, %9 : vector<8x16xf32>
    %22 = arith.addf %20, %21 : vector<8x16xf32>
    %23 = arith.truncf %13 : vector<8x16xf32> to vector<8x16xbf16>
    %24 = arith.truncf %16 : vector<8x16xf32> to vector<8x16xbf16>
    %25 = arith.truncf %19 : vector<8x16xf32> to vector<8x16xbf16>
    %26 = arith.truncf %22 : vector<8x16xf32> to vector<8x16xbf16>
    %27 = arith.truncf %8 : vector<8x32xf32> to vector<8x32xbf16>
    %28 = tpu.iota {dimensions = array<i32: 0>} : vector<8x8xi32>
    %29 = tpu.iota {dimensions = array<i32: 1>} : vector<8x8xi32>
    %30 = arith.cmpi sge, %28, %29 : vector<8x8xi32>
    %31 = vector.extract_strided_slice %23 {offsets = [0, 0], sizes = [8, 4], strides = [1, 1]} : vector<8x16xbf16> to vector<8x4xbf16>
    %32 = vector.extract_strided_slice %25 {offsets = [0, 0], sizes = [8, 4], strides = [1, 1]} : vector<8x16xbf16> to vector<8x4xbf16>
    "tpu.trace_start"() <{level = 10 : i32, message = "td,sd->ts"}> : () -> ()
    %cst_8 = arith.constant dense<0.000000e+00> : vector<8x8xf32>
    %33 = tpu.matmul %31, %32, %cst_8 {dimension_numbers = #tpu.dot_dimension_numbers<[1], [1], [0], [0], [0, 0, 1, 0], [], []>} : vector<8x4xbf16>, vector<8x4xbf16>, vector<8x8xf32> -> vector<8x8xf32>
    "tpu.trace_stop"() : () -> ()
    %34 = vector.extract_strided_slice %24 {offsets = [0, 0], sizes = [8, 4], strides = [1, 1]} : vector<8x16xbf16> to vector<8x4xbf16>
    %35 = vector.extract_strided_slice %26 {offsets = [0, 0], sizes = [8, 4], strides = [1, 1]} : vector<8x16xbf16> to vector<8x4xbf16>
    "tpu.trace_start"() <{level = 10 : i32, message = "td,sd->ts"}> : () -> ()
    %cst_9 = arith.constant dense<0.000000e+00> : vector<8x8xf32>
    %36 = tpu.matmul %34, %35, %cst_9 {dimension_numbers = #tpu.dot_dimension_numbers<[1], [1], [0], [0], [0, 0, 1, 0], [], []>} : vector<8x4xbf16>, vector<8x4xbf16>, vector<8x8xf32> -> vector<8x8xf32>
    "tpu.trace_stop"() : () -> ()
    %37 = arith.addf %33, %36 : vector<8x8xf32>
    %cst_10 = arith.constant -1.000000e+30 : f32
    %38 = vector.broadcast %cst_10 : f32 to vector<8x8xf32>
    %39 = arith.select %30, %37, %38 : vector<8x8xi1>, vector<8x8xf32>
    %cst_11 = arith.constant dense<0xFF800000> : vector<8xf32>
    %40 = vector.multi_reduction <maximumf>, %39, %cst_11 [1] : vector<8x8xf32> to vector<8xf32>
    %41 = vector.shape_cast %40 : vector<8xf32> to vector<8x1xf32>
    %42 = vector.broadcast %41 : vector<8x1xf32> to vector<8x8xf32>
    %43 = arith.subf %39, %42 : vector<8x8xf32>
    %44 = math.exp %43 : vector<8x8xf32>
    %cst_12 = arith.constant dense<0.000000e+00> : vector<8xf32>
    %45 = vector.multi_reduction <add>, %44, %cst_12 [1] : vector<8x8xf32> to vector<8xf32>
    %46 = vector.shape_cast %45 : vector<8xf32> to vector<8x1xf32>
    %47 = tpu.reciprocal %46 {approx = true} : vector<8x1xf32> -> vector<8x1xf32>
    %48 = vector.broadcast %47 : vector<8x1xf32> to vector<8x8xf32>
    %49 = arith.mulf %44, %48 : vector<8x8xf32>
    %50 = arith.truncf %49 : vector<8x8xf32> to vector<8x8xbf16>
    %51 = vector.extract_strided_slice %27 {offsets = [0, 0], sizes = [8, 8], strides = [1, 1]} : vector<8x32xbf16> to vector<8x8xbf16>
    %cst_13 = arith.constant dense<0.000000e+00> : vector<8x8xf32>
    %52 = tpu.matmul %50, %51, %cst_13 {dimension_numbers = #tpu.dot_dimension_numbers<[1], [0], [0], [1], [0, 0, 1, 1], [], []>} : vector<8x8xbf16>, vector<8x8xbf16>, vector<8x8xf32> -> vector<8x8xf32>
    %c0_14 = arith.constant 0 : index
    %c0_15 = arith.constant 0 : index
    %53 = vector.load %arg8[%c0_14, %c0_15] : memref<8x32xf32, #tpu.memory_space<vmem>>, vector<8x8xf32>
    tpu.vector_store %arg8[%c0_14, %c0_15], %52 {strides = array<i32>} : memref<8x32xf32, #tpu.memory_space<vmem>>, vector<8x8xf32>,
    %54 = vector.extract_strided_slice %23 {offsets = [0, 4], sizes = [8, 4], strides = [1, 1]} : vector<8x16xbf16> to vector<8x4xbf16>
    %55 = vector.extract_strided_slice %25 {offsets = [0, 4], sizes = [8, 4], strides = [1, 1]} : vector<8x16xbf16> to vector<8x4xbf16>
    "tpu.trace_start"() <{level = 10 : i32, message = "td,sd->ts"}> : () -> ()
    %cst_16 = arith.constant dense<0.000000e+00> : vector<8x8xf32>
    %56 = tpu.matmul %54, %55, %cst_16 {dimension_numbers = #tpu.dot_dimension_numbers<[1], [1], [0], [0], [0, 0, 1, 0], [], []>} : vector<8x4xbf16>, vector<8x4xbf16>, vector<8x8xf32> -> vector<8x8xf32>
    "tpu.trace_stop"() : () -> ()
    %57 = vector.extract_strided_slice %24 {offsets = [0, 4], sizes = [8, 4], strides = [1, 1]} : vector<8x16xbf16> to vector<8x4xbf16>
    %58 = vector.extract_strided_slice %26 {offsets = [0, 4], sizes = [8, 4], strides = [1, 1]} : vector<8x16xbf16> to vector<8x4xbf16>
    "tpu.trace_start"() <{level = 10 : i32, message = "td,sd->ts"}> : () -> ()
    %cst_17 = arith.constant dense<0.000000e+00> : vector<8x8xf32>
    %59 = tpu.matmul %57, %58, %cst_17 {dimension_numbers = #tpu.dot_dimension_numbers<[1], [1], [0], [0], [0, 0, 1, 0], [], []>} : vector<8x4xbf16>, vector<8x4xbf16>, vector<8x8xf32> -> vector<8x8xf32>
    "tpu.trace_stop"() : () -> ()
    %60 = arith.addf %56, %59 : vector<8x8xf32>
    %cst_18 = arith.constant -1.000000e+30 : f32
    %61 = vector.broadcast %cst_18 : f32 to vector<8x8xf32>
    %62 = arith.select %30, %60, %61 : vector<8x8xi1>, vector<8x8xf32>
    %cst_19 = arith.constant dense<0xFF800000> : vector<8xf32>
    %63 = vector.multi_reduction <maximumf>, %62, %cst_19 [1] : vector<8x8xf32> to vector<8xf32>
    %64 = vector.shape_cast %63 : vector<8xf32> to vector<8x1xf32>
    %65 = vector.broadcast %64 : vector<8x1xf32> to vector<8x8xf32>
    %66 = arith.subf %62, %65 : vector<8x8xf32>
    %67 = math.exp %66 : vector<8x8xf32>
    %cst_20 = arith.constant dense<0.000000e+00> : vector<8xf32>
    %68 = vector.multi_reduction <add>, %67, %cst_20 [1] : vector<8x8xf32> to vector<8xf32>
    %69 = vector.shape_cast %68 : vector<8xf32> to vector<8x1xf32>
    %70 = tpu.reciprocal %69 {approx = true} : vector<8x1xf32> -> vector<8x1xf32>
    %71 = vector.broadcast %70 : vector<8x1xf32> to vector<8x8xf32>
    %72 = arith.mulf %67, %71 : vector<8x8xf32>
    %73 = arith.truncf %72 : vector<8x8xf32> to vector<8x8xbf16>
    %74 = vector.extract_strided_slice %27 {offsets = [0, 8], sizes = [8, 8], strides = [1, 1]} : vector<8x32xbf16> to vector<8x8xbf16>
    %cst_21 = arith.constant dense<0.000000e+00> : vector<8x8xf32>
    %75 = tpu.matmul %73, %74, %cst_21 {dimension_numbers = #tpu.dot_dimension_numbers<[1], [0], [0], [1], [0, 0, 1, 1], [], []>} : vector<8x8xbf16>, vector<8x8xbf16>, vector<8x8xf32> -> vector<8x8xf32>
    %c0_22 = arith.constant 0 : index
    %c8 = arith.constant 8 : index
    %76 = vector.load %arg8[%c0_22, %c8] : memref<8x32xf32, #tpu.memory_space<vmem>>, vector<8x8xf32>
    tpu.vector_store %arg8[%c0_22, %c8], %75 {strides = array<i32>} : memref<8x32xf32, #tpu.memory_space<vmem>>, vector<8x8xf32>,
    %77 = vector.extract_strided_slice %23 {offsets = [0, 8], sizes = [8, 4], strides = [1, 1]} : vector<8x16xbf16> to vector<8x4xbf16>
    %78 = vector.extract_strided_slice %25 {offsets = [0, 8], sizes = [8, 4], strides = [1, 1]} : vector<8x16xbf16> to vector<8x4xbf16>
    "tpu.trace_start"() <{level = 10 : i32, message = "td,sd->ts"}> : () -> ()
    %cst_23 = arith.constant dense<0.000000e+00> : vector<8x8xf32>
    %79 = tpu.matmul %77, %78, %cst_23 {dimension_numbers = #tpu.dot_dimension_numbers<[1], [1], [0], [0], [0, 0, 1, 0], [], []>} : vector<8x4xbf16>, vector<8x4xbf16>, vector<8x8xf32> -> vector<8x8xf32>
    "tpu.trace_stop"() : () -> ()
    %80 = vector.extract_strided_slice %24 {offsets = [0, 8], sizes = [8, 4], strides = [1, 1]} : vector<8x16xbf16> to vector<8x4xbf16>
    %81 = vector.extract_strided_slice %26 {offsets = [0, 8], sizes = [8, 4], strides = [1, 1]} : vector<8x16xbf16> to vector<8x4xbf16>
    "tpu.trace_start"() <{level = 10 : i32, message = "td,sd->ts"}> : () -> ()
    %cst_24 = arith.constant dense<0.000000e+00> : vector<8x8xf32>
    %82 = tpu.matmul %80, %81, %cst_24 {dimension_numbers = #tpu.dot_dimension_numbers<[1], [1], [0], [0], [0, 0, 1, 0], [], []>} : vector<8x4xbf16>, vector<8x4xbf16>, vector<8x8xf32> -> vector<8x8xf32>
    "tpu.trace_stop"() : () -> ()
    %83 = arith.addf %79, %82 : vector<8x8xf32>
    %cst_25 = arith.constant -1.000000e+30 : f32
    %84 = vector.broadcast %cst_25 : f32 to vector<8x8xf32>
    %85 = arith.select %30, %83, %84 : vector<8x8xi1>, vector<8x8xf32>
    %cst_26 = arith.constant dense<0xFF800000> : vector<8xf32>
    %86 = vector.multi_reduction <maximumf>, %85, %cst_26 [1] : vector<8x8xf32> to vector<8xf32>
    %87 = vector.shape_cast %86 : vector<8xf32> to vector<8x1xf32>
    %88 = vector.broadcast %87 : vector<8x1xf32> to vector<8x8xf32>
    %89 = arith.subf %85, %88 : vector<8x8xf32>
    %90 = math.exp %89 : vector<8x8xf32>
    %cst_27 = arith.constant dense<0.000000e+00> : vector<8xf32>
    %91 = vector.multi_reduction <add>, %90, %cst_27 [1] : vector<8x8xf32> to vector<8xf32>
    %92 = vector.shape_cast %91 : vector<8xf32> to vector<8x1xf32>
    %93 = tpu.reciprocal %92 {approx = true} : vector<8x1xf32> -> vector<8x1xf32>
    %94 = vector.broadcast %93 : vector<8x1xf32> to vector<8x8xf32>
    %95 = arith.mulf %90, %94 : vector<8x8xf32>
    %96 = arith.truncf %95 : vector<8x8xf32> to vector<8x8xbf16>
    %97 = vector.extract_strided_slice %27 {offsets = [0, 16], sizes = [8, 8], strides = [1, 1]} : vector<8x32xbf16> to vector<8x8xbf16>
    %cst_28 = arith.constant dense<0.000000e+00> : vector<8x8xf32>
    %98 = tpu.matmul %96, %97, %cst_28 {dimension_numbers = #tpu.dot_dimension_numbers<[1], [0], [0], [1], [0, 0, 1, 1], [], []>} : vector<8x8xbf16>, vector<8x8xbf16>, vector<8x8xf32> -> vector<8x8xf32>
    %c0_29 = arith.constant 0 : index
    %c16 = arith.constant 16 : index
    %99 = vector.load %arg8[%c0_29, %c16] : memref<8x32xf32, #tpu.memory_space<vmem>>, vector<8x8xf32>
    tpu.vector_store %arg8[%c0_29, %c16], %98 {strides = array<i32>} : memref<8x32xf32, #tpu.memory_space<vmem>>, vector<8x8xf32>,
    %100 = vector.extract_strided_slice %23 {offsets = [0, 12], sizes = [8, 4], strides = [1, 1]} : vector<8x16xbf16> to vector<8x4xbf16>
    %101 = vector.extract_strided_slice %25 {offsets = [0, 12], sizes = [8, 4], strides = [1, 1]} : vector<8x16xbf16> to vector<8x4xbf16>
    "tpu.trace_start"() <{level = 10 : i32, message = "td,sd->ts"}> : () -> ()
    %cst_30 = arith.constant dense<0.000000e+00> : vector<8x8xf32>
    %102 = tpu.matmul %100, %101, %cst_30 {dimension_numbers = #tpu.dot_dimension_numbers<[1], [1], [0], [0], [0, 0, 1, 0], [], []>} : vector<8x4xbf16>, vector<8x4xbf16>, vector<8x8xf32> -> vector<8x8xf32>
    "tpu.trace_stop"() : () -> ()
    %103 = vector.extract_strided_slice %24 {offsets = [0, 12], sizes = [8, 4], strides = [1, 1]} : vector<8x16xbf16> to vector<8x4xbf16>
    %104 = vector.extract_strided_slice %26 {offsets = [0, 12], sizes = [8, 4], strides = [1, 1]} : vector<8x16xbf16> to vector<8x4xbf16>
    "tpu.trace_start"() <{level = 10 : i32, message = "td,sd->ts"}> : () -> ()
    %cst_31 = arith.constant dense<0.000000e+00> : vector<8x8xf32>
    %105 = tpu.matmul %103, %104, %cst_31 {dimension_numbers = #tpu.dot_dimension_numbers<[1], [1], [0], [0], [0, 0, 1, 0], [], []>} : vector<8x4xbf16>, vector<8x4xbf16>, vector<8x8xf32> -> vector<8x8xf32>
    "tpu.trace_stop"() : () -> ()
    %106 = arith.addf %102, %105 : vector<8x8xf32>
    %cst_32 = arith.constant -1.000000e+30 : f32
    %107 = vector.broadcast %cst_32 : f32 to vector<8x8xf32>
    %108 = arith.select %30, %106, %107 : vector<8x8xi1>, vector<8x8xf32>
    %cst_33 = arith.constant dense<0xFF800000> : vector<8xf32>
    %109 = vector.multi_reduction <maximumf>, %108, %cst_33 [1] : vector<8x8xf32> to vector<8xf32>
    %110 = vector.shape_cast %109 : vector<8xf32> to vector<8x1xf32>
    %111 = vector.broadcast %110 : vector<8x1xf32> to vector<8x8xf32>
    %112 = arith.subf %108, %111 : vector<8x8xf32>
    %113 = math.exp %112 : vector<8x8xf32>
    %cst_34 = arith.constant dense<0.000000e+00> : vector<8xf32>
    %114 = vector.multi_reduction <add>, %113, %cst_34 [1] : vector<8x8xf32> to vector<8xf32>
    %115 = vector.shape_cast %114 : vector<8xf32> to vector<8x1xf32>
    %116 = tpu.reciprocal %115 {approx = true} : vector<8x1xf32> -> vector<8x1xf32>
    %117 = vector.broadcast %116 : vector<8x1xf32> to vector<8x8xf32>
    %118 = arith.mulf %113, %117 : vector<8x8xf32>
    %119 = arith.truncf %118 : vector<8x8xf32> to vector<8x8xbf16>
    %120 = vector.extract_strided_slice %27 {offsets = [0, 24], sizes = [8, 8], strides = [1, 1]} : vector<8x32xbf16> to vector<8x8xbf16>
    %cst_35 = arith.constant dense<0.000000e+00> : vector<8x8xf32>
    %121 = tpu.matmul %119, %120, %cst_35 {dimension_numbers = #tpu.dot_dimension_numbers<[1], [0], [0], [1], [0, 0, 1, 1], [], []>} : vector<8x8xbf16>, vector<8x8xbf16>, vector<8x8xf32> -> vector<8x8xf32>
    %c0_36 = arith.constant 0 : index
    %c24 = arith.constant 24 : index
    %122 = vector.load %arg8[%c0_36, %c24] : memref<8x32xf32, #tpu.memory_space<vmem>>, vector<8x8xf32>
    tpu.vector_store %arg8[%c0_36, %c24], %121 {strides = array<i32>} : memref<8x32xf32, #tpu.memory_space<vmem>>, vector<8x8xf32>,
    %c0_37 = arith.constant 0 : index
    %c0_38 = arith.constant 0 : index
    %123 = vector.load %arg8[%c0_37, %c0_38] : memref<8x32xf32, #tpu.memory_space<vmem>>, vector<8x32xf32>
    %124 = arith.truncf %123 : vector<8x32xf32> to vector<8x32xbf16>
    %c0_39 = arith.constant 0 : index
    %c0_40 = arith.constant 0 : index
    %125 = vector.load %arg3[%c0_39, %c0_40] : memref<32x32xbf16, #tpu.memory_space<vmem>>, vector<32x32xbf16>
    %cst_41 = arith.constant dense<0.000000e+00> : vector<8x32xf32>
    %126 = tpu.matmul %124, %125, %cst_41 {dimension_numbers = #tpu.dot_dimension_numbers<[1], [0], [0], [1], [0, 0, 1, 1], [], []>} : vector<8x32xbf16>, vector<32x32xbf16>, vector<8x32xf32> -> vector<8x32xf32>
    %c0_42 = arith.constant 0 : index
    %c0_43 = arith.constant 0 : index
    %127 = vector.load %arg4[%c0_42, %c0_43] : memref<1x32xf32, #tpu.memory_space<vmem>>, vector<1x32xf32>
    %128 = vector.broadcast %127 : vector<1x32xf32> to vector<8x32xf32>
    %129 = arith.addf %126, %128 : vector<8x32xf32>
    %c0_44 = arith.constant 0 : index
    %c0_45 = arith.constant 0 : index
    %c0_46 = arith.constant 0 : index
    %130 = vector.load %arg7[%c0_44, %c0_45, %c0_46] : memref<1x8x32xf32, #tpu.memory_space<vmem>>, vector<1x8x32xf32>
    %131 = vector.shape_cast %130 : vector<1x8x32xf32> to vector<8x32xf32>
    %132 = vector.shape_cast %129 : vector<8x32xf32> to vector<1x8x32xf32>
    tpu.vector_store %arg7[%c0_44, %c0_45, %c0_46], %132 {strides = array<i32>} : memref<1x8x32xf32, #tpu.memory_space<vmem>>, vector<1x8x32xf32>,
    return
  }
  func.func @transform_0(%arg0: i32) -> (i32, i32, i32) {
    %c0_i32 = arith.constant 0 : i32
    %c0_i32_0 = arith.constant 0 : i32
    %c0_i32_1 = arith.constant 0 : i32
    return %arg0, %c0_i32, %c0_i32_0 : i32, i32, i32
  }
  func.func @transform_1(%arg0: i32) -> (i32, i32) {
    %c0_i32 = arith.constant 0 : i32
    %c0_i32_0 = arith.constant 0 : i32
    %c0_i32_1 = arith.constant 0 : i32
    return %c0_i32, %c0_i32_0 : i32, i32
  }
  func.func @transform_2(%arg0: i32) -> (i32, i32) {
    %c0_i32 = arith.constant 0 : i32
    %c0_i32_0 = arith.constant 0 : i32
    %c0_i32_1 = arith.constant 0 : i32
    return %c0_i32, %c0_i32_0 : i32, i32
  }
  func.func @transform_3(%arg0: i32) -> (i32, i32) {
    %c0_i32 = arith.constant 0 : i32
    %c0_i32_0 = arith.constant 0 : i32
    %c0_i32_1 = arith.constant 0 : i32
    return %c0_i32, %c0_i32_0 : i32, i32
  }
  func.func @transform_4(%arg0: i32) -> (i32, i32) {
    %c0_i32 = arith.constant 0 : i32
    %c0_i32_0 = arith.constant 0 : i32
    %c0_i32_1 = arith.constant 0 : i32
    return %c0_i32, %c0_i32_0 : i32, i32
  }
  func.func @transform_5(%arg0: i32) -> (i32, i32) {
    %c0_i32 = arith.constant 0 : i32
    %c0_i32_0 = arith.constant 0 : i32
    %c0_i32_1 = arith.constant 0 : i32
    return %c0_i32, %c0_i32_0 : i32, i32
  }
  func.func @transform_6(%arg0: i32) -> (i32, i32, i32) {
    %c0_i32 = arith.constant 0 : i32
    %c0_i32_0 = arith.constant 0 : i32
    %c0_i32_1 = arith.constant 0 : i32
    return %arg0, %c0_i32, %c0_i32_0 : i32, i32, i32
  }
}

</mosaic_0001>

<llo_original>
// kernel: tpu_custom_call.1
$region0: #{tpu_custom_call.1}
  #allocation0 [shape = 'u32[]', space=smem, size = 0x4, offset = 0x4, fixed_abs, tag = 'smem constant byte address 0x4 - core index']
  #allocation1 [shape = 'u32[72,128]{1,0:T(1,128)}', space=vmem, size = 0x9000, scoped, tag = 'internal scratch']
  #allocation2 [shape = 'f32[8,32]{1,0:T(8,128)}', space=vmem, size = 0x1000, scoped, tag = 'scratch operand']
  %s0 = inlined_call_operand.hbm [shape: bf16[2,8,32], index: 0, kind: input, shape index: {}]
  %s1 = inlined_call_operand.hbm [shape: bf16[32,96], index: 1, kind: input, shape index: {}]
  %s2 = inlined_call_operand.hbm [shape: bf16[32,32], index: 2, kind: input, shape index: {}]
  %s3 = inlined_call_operand.vmem [shape: f32[1,32], index: 3, kind: input, shape index: {}]
  %s4 = inlined_call_operand.hbm [shape: f32[16,16], index: 4, kind: input, shape index: {}]
  %s5 = inlined_call_operand.hbm [shape: f32[16,16], index: 5, kind: input, shape index: {}]
  %s6 = inlined_call_operand.hbm [shape: f32[2,8,32], index: 6, kind: output, shape index: {}]
  %s7 = sld [smem:[#allocation0]]
  $region77: #{tpu_custom_call.1} parent=0
    _
  %s9 = ssub.s32 1, %s7
  %s10 = scalar_select 0, %s9, %s7
  $region1: #{tpu_custom_call.1} parent=0
    #allocation3 [shape = 'u8[4096]{0}', space=vmem, size = 0x1000, scoped, tag = 'input window, operand 0']
    #allocation4 [shape = 's32[2]{0}', space=sflag, size = 0x8, scoped, tag = 'scoped memory for tpu_custom_call.1']
    #allocation5 [shape = 's32[2]{0}', space=sflag, size = 0x8, scoped, tag = 'scoped memory for tpu_custom_call.1']
    #allocation6 [shape = 'u8[8192]{0}', space=vmem, size = 0x2000, scoped, tag = 'input window, operand 1, single buffered']
    #allocation7 [shape = 's32[1]{0}', space=sflag, size = 0x4, scoped, tag = 'scoped memory for tpu_custom_call.1']
    #allocation8 [shape = 'u8[8192]{0}', space=vmem, size = 0x2000, scoped, tag = 'input window, operand 2, single buffered']
    #allocation9 [shape = 'u8[4096]{0}', space=vmem, size = 0x1000, scoped, tag = 'input window, operand 4, single buffered']
    #allocation10 [shape = 's32[1]{0}', space=sflag, size = 0x4, scoped, tag = 'scoped memory for tpu_custom_call.1']
    #allocation11 [shape = 'u8[4096]{0}', space=vmem, size = 0x1000, scoped, tag = 'input window, operand 5, single buffered']
    #allocation12 [shape = 'u8[8192]{0}', space=vmem, size = 0x2000, scoped, tag = 'output window, operand 0']
    %11 = vsyncpa [#allocation4], 0
    %s12 = scalar_lea.sflag [#allocation4], 1
    %13 = vsyncpa %s12, 0
    %14 = vsyncpa [#allocation7], 0
    %15 = vsyncpa [#allocation10], 0
    %16 = vsyncpa [#allocation5], 0
    %s17 = scalar_lea.sflag [#allocation5], 1
    %18 = vsyncpa %s17, 0
    loop: start=0, step=1, limit=4
    $region2: #{tpu_custom_call.1} parent=1 // loop_pre_header
      _
    $region3: #{tpu_custom_call.1} parent=1 // loop_header
      %s20 = sphi 0, %s24
      %p21 = scmp.ge.s32.totalorder %s20, 4
      %s30 = sphi 0, %s32
      %s33 = sphi 0, %s30
      %s34 = sphi 0, %s33
      %s50 = sphi 0, %s34
      %s54 = sphi 0, %s54
      %s56 = sphi 0, %s54
      %s57 = sphi 0, %s56
      %s71 = sphi 0, %s57
      %s75 = sphi 0, %s75
      %s77 = sphi 0, %s75
      %s78 = sphi 0, %s77
      %s92 = sphi 0, %s78
      %s96 = sphi 0, %s96
      %s98 = sphi 0, %s96
      %s99 = sphi 0, %s98
      %s113 = sphi 0, %s99
      %s117 = sphi 0, %s117
      %s119 = sphi 0, %s117
      %s120 = sphi 0, %s119
      %s134 = sphi 0, %s120
      %s138 = sphi 0, %s138
      %s140 = sphi 0, %s138
      %s141 = sphi 0, %s140
      %s155 = sphi 0, %s141
      %s161 = sphi 0, %s163
      %s164 = sphi 0, %s161
      %s165 = sphi 0, %s164
      %s181 = sphi 0, %s165
    $region4: #{tpu_custom_call.1} parent=1 // loop_header_branch
      %23 = sbr.rel (%p21) target = $region8
    $region5: #{tpu_custom_call.1} parent=1 // loop_body
      %s25 = ssub.s32 %s20, 1
      %s26 = ssub.s32 %s20, 2
      %s27 = sadd.s32 %s20, 1
      %s28 = ssub.s32 %s20, %s27
      %p29 = scmp.eq.s32.totalorder %s28, 0
      %s31 = sadd.s32 %s30, 1
      %s32 = scalar_select %p29, %s30, %s31
      %p35 = pneg %p29
      %p36 = scmp.eq.s32.totalorder %s20, 1
      %p37 = por %p35, %p36
      %p38 = scmp.ne.s32.totalorder %s30, %s33
      %p39 = scmp.eq.s32.totalorder %s20, 0
      %p40 = por %p38, %p39
      %p41 = scmp.ne.s32.totalorder %s30, %s33
      %p42 = scmp.eq.s32.totalorder %s25, 1
      %p43 = por %p41, %p42
      %p44 = scmp.ne.s32.totalorder %s33, %s34
      %p45 = scmp.eq.s32.totalorder %s25, 0
      %p46 = por %p44, %p45
      %p47 = scmp.ne.s32.totalorder %s33, %s34
      %p48 = scmp.eq.s32.totalorder %s26, 1
      %p49 = por %p47, %p48
      %p51 = scmp.ne.s32.totalorder %s34, %s50
      %p52 = scmp.eq.s32.totalorder %s26, 0
      %p53 = por %p51, %p52
      %s55 = sadd.s32 %s54, 1
      %p58 = scmp.eq.s32.totalorder %s20, 1
      %p59 = scmp.ne.s32.totalorder %s54, %s56
      %p60 = scmp.eq.s32.totalorder %s20, 0
      %p61 = por %p59, %p60
      %p62 = scmp.ne.s32.totalorder %s54, %s56
      %p63 = scmp.eq.s32.totalorder %s25, 1
      %p64 = por %p62, %p63
      %p65 = scmp.ne.s32.totalorder %s56, %s57
      %p66 = scmp.eq.s32.totalorder %s25, 0
      %p67 = por %p65, %p66
      %p68 = scmp.ne.s32.totalorder %s56, %s57
      %p69 = scmp.eq.s32.totalorder %s26, 1
      %p70 = por %p68, %p69
      %p72 = scmp.ne.s32.totalorder %s57, %s71
      %p73 = scmp.eq.s32.totalorder %s26, 0
      %p74 = por %p72, %p73
      %s76 = sadd.s32 %s75, 1
      %p79 = scmp.eq.s32.totalorder %s20, 1
      %p80 = scmp.ne.s32.totalorder %s75, %s77
      %p81 = scmp.eq.s32.totalorder %s20, 0
      %p82 = por %p80, %p81
      %p83 = scmp.ne.s32.totalorder %s75, %s77
      %p84 = scmp.eq.s32.totalorder %s25, 1
      %p85 = por %p83, %p84
      %p86 = scmp.ne.s32.totalorder %s77, %s78
      %p87 = scmp.eq.s32.totalorder %s25, 0
      %p88 = por %p86, %p87
      %p89 = scmp.ne.s32.totalorder %s77, %s78
      %p90 = scmp.eq.s32.totalorder %s26, 1
      %p91 = por %p89, %p90
      %p93 = scmp.ne.s32.totalorder %s78, %s92
      %p94 = scmp.eq.s32.totalorder %s26, 0
      %p95 = por %p93, %p94
      %s97 = sadd.s32 %s96, 1
      %p100 = scmp.eq.s32.totalorder %s20, 1
      %p101 = scmp.ne.s32.totalorder %s96, %s98
      %p102 = scmp.eq.s32.totalorder %s20, 0
      %p103 = por %p101, %p102
      %p104 = scmp.ne.s32.totalorder %s96, %s98
      %p105 = scmp.eq.s32.totalorder %s25, 1
      %p106 = por %p104, %p105
      %p107 = scmp.ne.s32.totalorder %s98, %s99
      %p108 = scmp.eq.s32.totalorder %s25, 0
      %p109 = por %p107, %p108
      %p110 = scmp.ne.s32.totalorder %s98, %s99
      %p111 = scmp.eq.s32.totalorder %s26, 1
      %p112 = por %p110, %p111
      %p114 = scmp.ne.s32.totalorder %s99, %s113
      %p115 = scmp.eq.s32.totalorder %s26, 0
      %p116 = por %p114, %p115
      %s118 = sadd.s32 %s117, 1
      %p121 = scmp.eq.s32.totalorder %s20, 1
      %p122 = scmp.ne.s32.totalorder %s117, %s119
      %p123 = scmp.eq.s32.totalorder %s20, 0
      %p124 = por %p122, %p123
      %p125 = scmp.ne.s32.totalorder %s117, %s119
      %p126 = scmp.eq.s32.totalorder %s25, 1
      %p127 = por %p125, %p126
      %p128 = scmp.ne.s32.totalorder %s119, %s120
      %p129 = scmp.eq.s32.totalorder %s25, 0
      %p130 = por %p128, %p129
      %p131 = scmp.ne.s32.totalorder %s119, %s120
      %p132 = scmp.eq.s32.totalorder %s26, 1
      %p133 = por %p131, %p132
      %p135 = scmp.ne.s32.totalorder %s120, %s134
      %p136 = scmp.eq.s32.totalorder %s26, 0
      %p137 = por %p135, %p136
      %s139 = sadd.s32 %s138, 1
      %p142 = scmp.eq.s32.totalorder %s20, 1
      %p143 = scmp.ne.s32.totalorder %s138, %s140
      %p144 = scmp.eq.s32.totalorder %s20, 0
      %p145 = por %p143, %p144
      %p146 = scmp.ne.s32.totalorder %s138, %s140
      %p147 = scmp.eq.s32.totalorder %s25, 1
      %p148 = por %p146, %p147
      %p149 = scmp.ne.s32.totalorder %s140, %s141
      %p150 = scmp.eq.s32.totalorder %s25, 0
      %p151 = por %p149, %p150
      %p152 = scmp.ne.s32.totalorder %s140, %s141
      %p153 = scmp.eq.s32.totalorder %s26, 1
      %p154 = por %p152, %p153
      %p156 = scmp.ne.s32.totalorder %s141, %s155
      %p157 = scmp.eq.s32.totalorder %s26, 0
      %p158 = por %p156, %p157
      %s159 = ssub.s32 %s20, %s27
      %p160 = scmp.eq.s32.totalorder %s159, 0
      %s162 = sadd.s32 %s161, 1
      %s163 = scalar_select %p160, %s161, %s162
      %p166 = pneg %p160
      %p167 = scmp.eq.s32.totalorder %s20, 1
      %p168 = por %p166, %p167
      %p169 = scmp.ne.s32.totalorder %s161, %s164
      %p170 = scmp.eq.s32.totalorder %s20, 0
      %p171 = por %p169, %p170
      %p172 = scmp.ne.s32.totalorder %s161, %s164
      %p173 = scmp.eq.s32.totalorder %s25, 1
      %p174 = por %p172, %p173
      %p175 = scmp.ne.s32.totalorder %s164, %s165
      %p176 = scmp.eq.s32.totalorder %s25, 0
      %p177 = por %p175, %p176
      %p178 = scmp.ne.s32.totalorder %s164, %s165
      %p179 = scmp.eq.s32.totalorder %s26, 1
      %p180 = por %p178, %p179
      %p182 = scmp.ne.s32.totalorder %s165, %s181
      %p183 = scmp.eq.s32.totalorder %s26, 0
      %p184 = por %p182, %p183
      %p185 = scmp.le.s32.totalorder 1, %s20
      %p186 = scmp.lt.s32.totalorder %s20, 3
      %p187 = pnand %p185, %p186
      %p188 = pneg %p187
      // Predicated region
      $region9: #{tpu_custom_call.1} parent=5 // pred_check
        _
      $region10: #{tpu_custom_call.1} parent=5 // pred_check_branch
        %190 = sbr.rel (%p187) target = $region12
      $region11: #{tpu_custom_call.1} parent=5 // pred_region
        %s191 = ssub.s32 %s20, 1
        // Predicated region
        $region13: #{tpu_custom_call.1} parent=11 // pred_check
          %p192 = pneg %p67
        $region14: #{tpu_custom_call.1} parent=11 // pred_check_branch
          %194 = sbr.rel (%p192) target = $region16
        $region15: #{tpu_custom_call.1} parent=11 // pred_region
          %196 = vsyncadd [#allocation7], 0
          %s197 = sshll.u32 %s1, 4
          %s198 = int_to_ptr.hbm [resolvable:$true] %s197
          %s199 = sshll.u32 [#allocation6], 4
          %s200 = int_to_ptr.vmem [resolvable:$true] %s199
          %205 = dma.hbm_to_vmem [thread:$0]  %s198, 256, %s200, [#allocation7], 64, 64, 4
        $region16: #{tpu_custom_call.1} parent=11 // pred_fallthru
          _
        // Predicated region
        $region17: #{tpu_custom_call.1} parent=11 // pred_check
          %p206 = pneg %p88
        $region18: #{tpu_custom_call.1} parent=11 // pred_check_branch
          %208 = sbr.rel (%p206) target = $region20
        $region19: #{tpu_custom_call.1} parent=11 // pred_region
          %210 = vsyncadd [#allocation7], 0
          %s211 = sshll.u32 %s2, 4
          %s212 = int_to_ptr.hbm [resolvable:$true] %s211
          %s213 = sshll.u32 [#allocation8], 4
          %s214 = int_to_ptr.vmem [resolvable:$true] %s213
          %219 = dma.hbm_to_vmem [thread:$0]  %s212, 256, %s214, [#allocation7], 64, 64, 4
        $region20: #{tpu_custom_call.1} parent=11 // pred_fallthru
          _
        // Predicated region
        $region21: #{tpu_custom_call.1} parent=11 // pred_check
          %p220 = pneg %p109
        $region22: #{tpu_custom_call.1} parent=11 // pred_check_branch
          %222 = sbr.rel (%p220) target = $region24
        $region23: #{tpu_custom_call.1} parent=11 // pred_region
          _
        $region24: #{tpu_custom_call.1} parent=11 // pred_fallthru
          _
        // Predicated region
        $region25: #{tpu_custom_call.1} parent=11 // pred_check
          %p223 = pneg %p130
        $region26: #{tpu_custom_call.1} parent=11 // pred_check_branch
          %225 = sbr.rel (%p223) target = $region28
        $region27: #{tpu_custom_call.1} parent=11 // pred_region
          %227 = vsyncadd [#allocation10], 0
          %s229 = sshll.u32 %s4, 4
          %s230 = int_to_ptr.hbm [resolvable:$true] %s229
          %s231 = sshll.u32 [#allocation9], 4
          %s232 = int_to_ptr.vmem [resolvable:$true] %s231
          %234 = dma.hbm_to_vmem [thread:$0]  %s230, 128, %s232, [#allocation10]
        $region28: #{tpu_custom_call.1} parent=11 // pred_fallthru
          _
        // Predicated region
        $region29: #{tpu_custom_call.1} parent=11 // pred_check
          %p235 = pneg %p151
        $region30: #{tpu_custom_call.1} parent=11 // pred_check_branch
          %237 = sbr.rel (%p235) target = $region32
        $region31: #{tpu_custom_call.1} parent=11 // pred_region
          %239 = vsyncadd [#allocation10], 0
          %s241 = sshll.u32 %s5, 4
          %s242 = int_to_ptr.hbm [resolvable:$true] %s241
          %s243 = sshll.u32 [#allocation11], 4
          %s244 = int_to_ptr.vmem [resolvable:$true] %s243
          %246 = dma.hbm_to_vmem [thread:$0]  %s242, 128, %s244, [#allocation10]
        $region32: #{tpu_custom_call.1} parent=11 // pred_fallthru
          _
      $region12: #{tpu_custom_call.1} parent=5 // pred_fallthru
        _
      %p247 = scmp.lt.s32.totalorder %s20, 2
      // Predicated region
      $region33: #{tpu_custom_call.1} parent=5 // pred_check
        %p248 = pneg %p247
      $region34: #{tpu_custom_call.1} parent=5 // pred_check_branch
        %250 = sbr.rel (%p248) target = $region36
      $region35: #{tpu_custom_call.1} parent=5 // pred_region
        // Predicated region
        $region37: #{tpu_custom_call.1} parent=35 // pred_check
          %p251 = pneg %p40
        $region38: #{tpu_custom_call.1} parent=35 // pred_check_branch
          %253 = sbr.rel (%p251) target = $region40
        $region39: #{tpu_custom_call.1} parent=35 // pred_region
          %s254 = sand.u32 %s30, 1
          %s255 = scalar_lea.sflag [#allocation4], %s254
          %s256 = sand.u32 %s30, 1
          %s257 = smul.addr %s256, 4
          %s258 = scalar_lea.vmem [#allocation3], %s257
          %260 = vsyncadd %s255, 0
          %s261 = smul.addr %s20, 4
          %s262 = scalar_lea.hbm %s0, %s261
          %s264 = sshll.u32 %s262, 4
          %s265 = int_to_ptr.hbm [resolvable:$true] %s264
          %s266 = sshll.u32 %s258, 4
          %s267 = int_to_ptr.vmem [resolvable:$true] %s266
          %269 = dma.hbm_to_vmem [thread:$0]  %s265, 64, %s267, %s255
        $region40: #{tpu_custom_call.1} parent=35 // pred_fallthru
          _
      $region36: #{tpu_custom_call.1} parent=5 // pred_fallthru
        _
      %p270 = scmp.le.s32.totalorder 1, %s20
      %p271 = scmp.lt.s32.totalorder %s20, 3
      %p272 = pnand %p270, %p271
      %p273 = pneg %p272
      // Predicated region
      $region41: #{tpu_custom_call.1} parent=5 // pred_check
        _
      $region42: #{tpu_custom_call.1} parent=5 // pred_check_branch
        %275 = sbr.rel (%p272) target = $region44
      $region43: #{tpu_custom_call.1} parent=5 // pred_region
        %s276 = ssub.s32 %s20, 1
        %s277 = sand.u32 %s33, 1
        %s278 = scalar_lea.sflag [#allocation4], %s277
        %s279 = sand.u32 %s33, 1
        %s280 = smul.addr %s279, 4
        %s281 = scalar_lea.vmem [#allocation3], %s280
        // Predicated region
        $region45: #{tpu_custom_call.1} parent=43 // pred_check
          %p282 = pneg %p46
        $region46: #{tpu_custom_call.1} parent=43 // pred_check_branch
          %284 = sbr.rel (%p282) target = $region48
        $region47: #{tpu_custom_call.1} parent=43 // pred_region
          %286 = dma.done %s278, 64
        $region48: #{tpu_custom_call.1} parent=43 // pred_fallthru
          _
        // Predicated region
        $region49: #{tpu_custom_call.1} parent=43 // pred_check
          %p287 = pneg %p67
        $region50: #{tpu_custom_call.1} parent=43 // pred_check_branch
          %289 = sbr.rel (%p287) target = $region52
        $region51: #{tpu_custom_call.1} parent=43 // pred_region
          %291 = dma.done [#allocation7], 256
        $region52: #{tpu_custom_call.1} parent=43 // pred_fallthru
          _
        // Predicated region
        $region53: #{tpu_custom_call.1} parent=43 // pred_check
          %p292 = pneg %p88
        $region54: #{tpu_custom_call.1} parent=43 // pred_check_branch
          %294 = sbr.rel (%p292) target = $region56
        $region55: #{tpu_custom_call.1} parent=43 // pred_region
          %296 = dma.done [#allocation7], 256
        $region56: #{tpu_custom_call.1} parent=43 // pred_fallthru
          _
        // Predicated region
        $region57: #{tpu_custom_call.1} parent=43 // pred_check
          %p297 = pneg %p130
        $region58: #{tpu_custom_call.1} parent=43 // pred_check_branch
          %299 = sbr.rel (%p297) target = $region60
        $region59: #{tpu_custom_call.1} parent=43 // pred_region
          %301 = dma.done [#allocation10], 128
        $region60: #{tpu_custom_call.1} parent=43 // pred_fallthru
          _
        // Predicated region
        $region61: #{tpu_custom_call.1} parent=43 // pred_check
          %p302 = pneg %p151
        $region62: #{tpu_custom_call.1} parent=43 // pred_check_branch
          %304 = sbr.rel (%p302) target = $region64
        $region63: #{tpu_custom_call.1} parent=43 // pred_region
          %306 = dma.done [#allocation10], 128
        $region64: #{tpu_custom_call.1} parent=43 // pred_fallthru
          _
        %s307 = sand.u32 %s33, 1
        %s308 = scalar_lea.sflag [#allocation4], %s307
        %s309 = sand.u32 %s33, 1
        %s310 = smul.addr %s309, 4
        %s311 = scalar_lea.vmem [#allocation3], %s310
        %p312 = pneg %p46
        %p313 = pneg %p43
        %p314 = pneg %p67
        %p315 = pneg %p64
        %p316 = pneg %p88
        %p317 = pneg %p85
        %p318 = pneg %p109
        %p319 = pneg %p106
        %p320 = pneg %p130
        %p321 = pneg %p127
        %p322 = pneg %p151
        %p323 = pneg %p148
        %p324 = pneg %p177
        %p325 = pneg %p174
        %s326 = sand.u32 %s164, 1
        %s327 = scalar_lea.sflag [#allocation5], %s326
        %s328 = sand.u32 %s164, 1
        %s329 = smul.addr %s328, 8
        %s330 = scalar_lea.vmem [#allocation12], %s329
        %v332 = vld [vmem:[%s281] sm:$0xf]
        %v333 = vld [vmem:[#allocation6] sm:$0xf]
        %v334 = vld [vmem:[#allocation6 + $0x4] sm:$0xf]
        %v335 = vld [vmem:[#allocation6 + $0x8] sm:$0xf]
        %v336 = vld [vmem:[#allocation6 + $0xc] sm:$0xf]
        %v341 = vunpack.c.l.b16 %v333
        %v342 = vunpack.c.l.b16 %v334
        %v343 = vunpack.c.l.b16 %v335
        %v344 = vunpack.c.l.b16 %v336
        %v345 = vpack.c.b16 %v342, %v341
        %v346 = vpack.c.b16 %v344, %v343
        %vm349 = vcmask 261120
        %v351 = vsel %vm349, %v332, 0
        %353 = vmatpush.bf16.msra.mxu0 0
        %354 = vmatpush.bf16.msra.mxu0 0
        %355 = vmatpush.bf16.msra.mxu0 0
        %356 = vmatpush.bf16.msra.mxu0 0
        %357 = vmatpush.bf16.msra.mxu0 0
        %358 = vmatpush.bf16.msra.mxu0 0
        %359 = vmatpush.bf16.msra.mxu0 %v346
        %360 = vmatpush.bf16.msra.mxu0 %v345
        %361 = vmatmul.bf16.gmra.mxu0 %v351
        %v362 = vpop.f32.mrf.mxu0
        %v363 = vadd.f32 0.0, %v362
        %v364 = vpop.f32.mrf.mxu0
        %365 = vdwg.mxu0
        %v366 = vld [vmem:[#allocation9] sm:$0xff]
        %v367 = vld [vmem:[#allocation11] sm:$0xff]
        %v368 = vmul.f32 %v363, %v366
        %370 = vrot.lane.b32.xlu0 %v367, 16
        %v371 = vpop.permute.xlu0 %370
        %v373 = vmul.f32 %v363, %v371
        %375 = vrot.lane.b32.xlu0 %v373, 112
        %v376 = vpop.permute.xlu0 %375
        %v378 = vsub.f32 %v368, %v376
        %v379 = vmul.f32 %v363, %v367
        %381 = vrot.lane.b32.xlu0 %v366, 16
        %v382 = vpop.permute.xlu0 %381
        %v384 = vmul.f32 %v363, %v382
        %386 = vrot.lane.b32.xlu0 %v384, 112
        %v387 = vpop.permute.xlu0 %386
        %v389 = vadd.f32 %v379, %v387
        %390 = vrot.lane.b32.xlu0 %v366, 32
        %v391 = vpop.permute.xlu0 %390
        %v393 = vmul.f32 %v363, %v391
        %394 = vrot.lane.b32.xlu0 %v367, 48
        %v395 = vpop.permute.xlu0 %394
        %v397 = vmul.f32 %v363, %v395
        %399 = vrot.lane.b32.xlu0 %v397, 112
        %v400 = vpop.permute.xlu0 %399
        %v402 = vsub.f32 %v393, %v400
        %403 = vrot.lane.b32.xlu0 %v367, 32
        %v404 = vpop.permute.xlu0 %403
        %v406 = vmul.f32 %v363, %v404
        %407 = vrot.lane.b32.xlu0 %v366, 48
        %v408 = vpop.permute.xlu0 %407
        %v410 = vmul.f32 %v363, %v408
        %412 = vrot.lane.b32.xlu0 %v410, 112
        %v413 = vpop.permute.xlu0 %412
        %v415 = vadd.f32 %v406, %v413
        %v416 = vpack.c.bf16 %v378, %v378
        %v417 = vpack.c.bf16 %v389, %v389
        %v418 = vpack.c.bf16 %v402, %v402
        %v419 = vpack.c.bf16 %v415, %v415
        %v420 = vpack.c.bf16 %v363, %v363
        %v421 = vlaneseq
        %v422 = vshrl.u32 %v421, 7
        %v423 = vlaneseq
        %v424 = vand.u32 %v423, 127
        %vm425 = vcmp.ge.s32.totalorder %v422, %v424
        %v427 = vunpack.c.l.b16 %v419
        %v428 = vpack.c.b16 %v427, %v427
        %429 = vrot.lane.b32.xlu0 %v428, 96
        %v430 = vpop.permute.xlu0 %429
        %vm431 = vcmask 31744
        %v433 = vsel %vm431, %v417, 0
        %v436 = vsel %vm431, %v430, 0
        %438 = vmatpush.bf16.xpose.msra.mxu0 0
        %439 = vmatpush.bf16.xpose.msra.mxu0 0
        %440 = vmatpush.bf16.xpose.msra.mxu0 0
        %441 = vmatpush.bf16.xpose.msra.mxu0 0
        %442 = vmatpush.bf16.xpose.msra.mxu0 0
        %443 = vmatpush.bf16.xpose.msra.mxu0 0
        %444 = vmatpush.bf16.xpose.msra.mxu0 0
        %445 = vmatpush.bf16.xpose.msra.mxu0 %v436
        %446 = vmatmul.bf16.gmra.mxu0 %v433
        %v447 = vpop.f32.mrf.mxu0
        %v448 = vadd.f32 0.0, %v447
        %v449 = vpop.f32.mrf.mxu0
        %450 = vdwg.mxu0
        %v452 = vunpack.c.l.b16 %v418
        %v453 = vpack.c.b16 %v452, %v452
        %454 = vrot.lane.b32.xlu0 %v453, 96
        %v455 = vpop.permute.xlu0 %454
        %v457 = vsel %vm431, %v416, 0
        %v460 = vsel %vm431, %v455, 0
        %462 = vmatpush.bf16.xpose.msra.mxu0 0
        %463 = vmatpush.bf16.xpose.msra.mxu0 0
        %464 = vmatpush.bf16.xpose.msra.mxu0 0
        %465 = vmatpush.bf16.xpose.msra.mxu0 0
        %466 = vmatpush.bf16.xpose.msra.mxu0 0
        %467 = vmatpush.bf16.xpose.msra.mxu0 0
        %468 = vmatpush.bf16.xpose.msra.mxu0 0
        %469 = vmatpush.bf16.xpose.msra.mxu0 %v460
        %470 = vmatmul.bf16.gmra.mxu0 %v457
        %v471 = vpop.f32.mrf.mxu0
        %v472 = vadd.f32 %v448, %v471
        %v473 = vpop.f32.mrf.mxu0
        %474 = vdwg.mxu0
        %v475 = vsel %vm425, %v472, -1e+30
        %vm476 = vcmask 64512
        %v477 = vsel %vm476, %v475, -inf
        %478 = vmax.xlane.f32.xlu0 %v477
        %v479 = vpop.xlane.xlu0 %478
        %v480 = vsub.f32 %v475, %v479
        %v481 = vmul.f32 %v480, 1.442695
        %v482 = vpow.pop %v481
        %v483 = vsel %vm476, %v482, 0.0
        %484 = vadd.xlane.f32.xlu0 %v483
        %v485 = vpop.xlane.xlu0 %484
        %v486 = vrcp.pop %v485
        %v487 = vmul.f32 %v482, %v486
        %v488 = vpack.c.bf16 %v487, %v487
        %v490 = vunpack.c.l.b16 %v420
        %v491 = vpack.c.b16 %v490, %v490
        %492 = vrot.lane.b32.xlu0 %v491, 64
        %v493 = vpop.permute.xlu0 %492
        %v495 = vsel %vm476, %v488, 0
        %vm497 = vcmask 1043456
        %v499 = vsel %vm497, %v493, 0
        %501 = vmatpush.bf16.msra.mxu0 0
        %502 = vmatpush.bf16.msra.mxu0 0
        %503 = vmatpush.bf16.msra.mxu0 0
        %504 = vmatpush.bf16.msra.mxu0 0
        %505 = vmatpush.bf16.msra.mxu0 0
        %506 = vmatpush.bf16.msra.mxu0 0
        %507 = vmatpush.bf16.msra.mxu0 0
        %508 = vmatpush.bf16.msra.mxu0 %v499
        %509 = vmatmul.bf16.gmra.mxu0 %v495
        %v510 = vpop.f32.mrf.mxu0
        %v511 = vadd.f32 0.0, %v510
        %v512 = vpop.f32.mrf.mxu0
        %513 = vdwg.mxu0
        %514 = vst.msk [vmem:[#allocation2] sm:$0xff] %vm476, %v511
        %v516 = vunpack.c.l.b16 %v417
        %v517 = vpack.c.b16 %v516, %v516
        %518 = vrot.lane.b32.xlu0 %v517, 124
        %v519 = vpop.permute.xlu0 %518
        %520 = vrot.lane.b32.xlu0 %v428, 92
        %v521 = vpop.permute.xlu0 %520
        %v523 = vsel %vm431, %v519, 0
        %v526 = vsel %vm431, %v521, 0
        %528 = vmatpush.bf16.xpose.msra.mxu0 0
        %529 = vmatpush.bf16.xpose.msra.mxu0 0
        %530 = vmatpush.bf16.xpose.msra.mxu0 0
        %531 = vmatpush.bf16.xpose.msra.mxu0 0
        %532 = vmatpush.bf16.xpose.msra.mxu0 0
        %533 = vmatpush.bf16.xpose.msra.mxu0 0
        %534 = vmatpush.bf16.xpose.msra.mxu0 0
        %535 = vmatpush.bf16.xpose.msra.mxu0 %v526
        %536 = vmatmul.bf16.gmra.mxu0 %v523
        %v537 = vpop.f32.mrf.mxu0
        %v538 = vadd.f32 0.0, %v537
        %v539 = vpop.f32.mrf.mxu0
        %540 = vdwg.mxu0
        %v542 = vunpack.c.l.b16 %v416
        %v543 = vpack.c.b16 %v542, %v542
        %544 = vrot.lane.b32.xlu0 %v543, 124
        %v545 = vpop.permute.xlu0 %544
        %546 = vrot.lane.b32.xlu0 %v453, 92
        %v547 = vpop.permute.xlu0 %546
        %v549 = vsel %vm431, %v545, 0
        %v552 = vsel %vm431, %v547, 0
        %554 = vmatpush.bf16.xpose.msra.mxu0 0
        %555 = vmatpush.bf16.xpose.msra.mxu0 0
        %556 = vmatpush.bf16.xpose.msra.mxu0 0
        %557 = vmatpush.bf16.xpose.msra.mxu0 0
        %558 = vmatpush.bf16.xpose.msra.mxu0 0
        %559 = vmatpush.bf16.xpose.msra.mxu0 0
        %560 = vmatpush.bf16.xpose.msra.mxu0 0
        %561 = vmatpush.bf16.xpose.msra.mxu0 %v552
        %562 = vmatmul.bf16.gmra.mxu0 %v549
        %v563 = vpop.f32.mrf.mxu0
        %v564 = vadd.f32 %v538, %v563
        %v565 = vpop.f32.mrf.mxu0
        %566 = vdwg.mxu0
        %v567 = vsel %vm425, %v564, -1e+30
        %v568 = vsel %vm476, %v567, -inf
        %569 = vmax.xlane.f32.xlu0 %v568
        %v570 = vpop.xlane.xlu0 %569
        %v571 = vsub.f32 %v567, %v570
        %v572 = vmul.f32 %v571, 1.442695
        %v573 = vpow.pop %v572
        %v574 = vsel %vm476, %v573, 0.0
        %575 = vadd.xlane.f32.xlu0 %v574
        %v576 = vpop.xlane.xlu0 %575
        %v577 = vrcp.pop %v576
        %v578 = vmul.f32 %v573, %v577
        %v579 = vpack.c.bf16 %v578, %v578
        %580 = vrot.lane.b32.xlu0 %v491, 56
        %v581 = vpop.permute.xlu0 %580
        %v583 = vsel %vm476, %v579, 0
        %v586 = vsel %vm497, %v581, 0
        %588 = vmatpush.bf16.msra.mxu0 0
        %589 = vmatpush.bf16.msra.mxu0 0
        %590 = vmatpush.bf16.msra.mxu0 0
        %591 = vmatpush.bf16.msra.mxu0 0
        %592 = vmatpush.bf16.msra.mxu0 0
        %593 = vmatpush.bf16.msra.mxu0 0
        %594 = vmatpush.bf16.msra.mxu0 0
        %595 = vmatpush.bf16.msra.mxu0 %v586
        %596 = vmatmul.bf16.gmra.mxu0 %v583
        %v597 = vpop.f32.mrf.mxu0
        %v598 = vadd.f32 0.0, %v597
        %v599 = vpop.f32.mrf.mxu0
        %600 = vdwg.mxu0
        %602 = vrot.lane.b32.xlu0 %v598, 8
        %v603 = vpop.permute.xlu0 %602
        %vm605 = vcmask 130112
        %606 = vst.msk [vmem:[#allocation2] sm:$0xff] %vm605, %v603
        %607 = vrot.lane.b32.xlu0 %v517, 120
        %v608 = vpop.permute.xlu0 %607
        %609 = vrot.lane.b32.xlu0 %v428, 88
        %v610 = vpop.permute.xlu0 %609
        %v612 = vsel %vm431, %v608, 0
        %v615 = vsel %vm431, %v610, 0
        %617 = vmatpush.bf16.xpose.msra.mxu0 0
        %618 = vmatpush.bf16.xpose.msra.mxu0 0
        %619 = vmatpush.bf16.xpose.msra.mxu0 0
        %620 = vmatpush.bf16.xpose.msra.mxu0 0
        %621 = vmatpush.bf16.xpose.msra.mxu0 0
        %622 = vmatpush.bf16.xpose.msra.mxu0 0
        %623 = vmatpush.bf16.xpose.msra.mxu0 0
        %624 = vmatpush.bf16.xpose.msra.mxu0 %v615
        %625 = vmatmul.bf16.gmra.mxu0 %v612
        %v626 = vpop.f32.mrf.mxu0
        %v627 = vadd.f32 0.0, %v626
        %v628 = vpop.f32.mrf.mxu0
        %629 = vdwg.mxu0
        %630 = vrot.lane.b32.xlu0 %v543, 120
        %v631 = vpop.permute.xlu0 %630
        %632 = vrot.lane.b32.xlu0 %v453, 88
        %v633 = vpop.permute.xlu0 %632
        %v635 = vsel %vm431, %v631, 0
        %v638 = vsel %vm431, %v633, 0
        %640 = vmatpush.bf16.xpose.msra.mxu0 0
        %641 = vmatpush.bf16.xpose.msra.mxu0 0
        %642 = vmatpush.bf16.xpose.msra.mxu0 0
        %643 = vmatpush.bf16.xpose.msra.mxu0 0
        %644 = vmatpush.bf16.xpose.msra.mxu0 0
        %645 = vmatpush.bf16.xpose.msra.mxu0 0
        %646 = vmatpush.bf16.xpose.msra.mxu0 0
        %647 = vmatpush.bf16.xpose.msra.mxu0 %v638
        %648 = vmatmul.bf16.gmra.mxu0 %v635
        %v649 = vpop.f32.mrf.mxu0
        %v650 = vadd.f32 %v627, %v649
        %v651 = vpop.f32.mrf.mxu0
        %652 = vdwg.mxu0
        %v653 = vsel %vm425, %v650, -1e+30
        %v654 = vsel %vm476, %v653, -inf
        %655 = vmax.xlane.f32.xlu0 %v654
        %v656 = vpop.xlane.xlu0 %655
        %v657 = vsub.f32 %v653, %v656
        %v658 = vmul.f32 %v657, 1.442695
        %v659 = vpow.pop %v658
        %v660 = vsel %vm476, %v659, 0.0
        %661 = vadd.xlane.f32.xlu0 %v660
        %v662 = vpop.xlane.xlu0 %661
        %v663 = vrcp.pop %v662
        %v664 = vmul.f32 %v659, %v663
        %v665 = vpack.c.bf16 %v664, %v664
        %666 = vrot.lane.b32.xlu0 %v491, 48
        %v667 = vpop.permute.xlu0 %666
        %v669 = vsel %vm476, %v665, 0
        %v672 = vsel %vm497, %v667, 0
        %674 = vmatpush.bf16.msra.mxu0 0
        %675 = vmatpush.bf16.msra.mxu0 0
        %676 = vmatpush.bf16.msra.mxu0 0
        %677 = vmatpush.bf16.msra.mxu0 0
        %678 = vmatpush.bf16.msra.mxu0 0
        %679 = vmatpush.bf16.msra.mxu0 0
        %680 = vmatpush.bf16.msra.mxu0 0
        %681 = vmatpush.bf16.msra.mxu0 %v672
        %682 = vmatmul.bf16.gmra.mxu0 %v669
        %v683 = vpop.f32.mrf.mxu0
        %v684 = vadd.f32 0.0, %v683
        %v685 = vpop.f32.mrf.mxu0
        %686 = vdwg.mxu0
        %688 = vrot.lane.b32.xlu0 %v684, 16
        %v689 = vpop.permute.xlu0 %688
        %vm691 = vcmask 195712
        %692 = vst.msk [vmem:[#allocation2] sm:$0xff] %vm691, %v689
        %693 = vrot.lane.b32.xlu0 %v517, 116
        %v694 = vpop.permute.xlu0 %693
        %695 = vrot.lane.b32.xlu0 %v428, 84
        %v696 = vpop.permute.xlu0 %695
        %v698 = vsel %vm431, %v694, 0
        %v701 = vsel %vm431, %v696, 0
        %703 = vmatpush.bf16.xpose.msra.mxu0 0
        %704 = vmatpush.bf16.xpose.msra.mxu0 0
        %705 = vmatpush.bf16.xpose.msra.mxu0 0
        %706 = vmatpush.bf16.xpose.msra.mxu0 0
        %707 = vmatpush.bf16.xpose.msra.mxu0 0
        %708 = vmatpush.bf16.xpose.msra.mxu0 0
        %709 = vmatpush.bf16.xpose.msra.mxu0 0
        %710 = vmatpush.bf16.xpose.msra.mxu0 %v701
        %711 = vmatmul.bf16.gmra.mxu0 %v698
        %v712 = vpop.f32.mrf.mxu0
        %v713 = vadd.f32 0.0, %v712
        %v714 = vpop.f32.mrf.mxu0
        %715 = vdwg.mxu0
        %716 = vrot.lane.b32.xlu0 %v543, 116
        %v717 = vpop.permute.xlu0 %716
        %718 = vrot.lane.b32.xlu0 %v453, 84
        %v719 = vpop.permute.xlu0 %718
        %v721 = vsel %vm431, %v717, 0
        %v724 = vsel %vm431, %v719, 0
        %726 = vmatpush.bf16.xpose.msra.mxu0 0
        %727 = vmatpush.bf16.xpose.msra.mxu0 0
        %728 = vmatpush.bf16.xpose.msra.mxu0 0
        %729 = vmatpush.bf16.xpose.msra.mxu0 0
        %730 = vmatpush.bf16.xpose.msra.mxu0 0
        %731 = vmatpush.bf16.xpose.msra.mxu0 0
        %732 = vmatpush.bf16.xpose.msra.mxu0 0
        %733 = vmatpush.bf16.xpose.msra.mxu0 %v724
        %734 = vmatmul.bf16.gmra.mxu0 %v721
        %v735 = vpop.f32.mrf.mxu0
        %v736 = vadd.f32 %v713, %v735
        %v737 = vpop.f32.mrf.mxu0
        %738 = vdwg.mxu0
        %v739 = vsel %vm425, %v736, -1e+30
        %v740 = vsel %vm476, %v739, -inf
        %741 = vmax.xlane.f32.xlu0 %v740
        %v742 = vpop.xlane.xlu0 %741
        %v743 = vsub.f32 %v739, %v742
        %v744 = vmul.f32 %v743, 1.442695
        %v745 = vpow.pop %v744
        %v746 = vsel %vm476, %v745, 0.0
        %747 = vadd.xlane.f32.xlu0 %v746
        %v748 = vpop.xlane.xlu0 %747
        %v749 = vrcp.pop %v748
        %v750 = vmul.f32 %v745, %v749
        %v751 = vpack.c.bf16 %v750, %v750
        %752 = vrot.lane.b32.xlu0 %v491, 40
        %v753 = vpop.permute.xlu0 %752
        %v755 = vsel %vm476, %v751, 0
        %v758 = vsel %vm497, %v753, 0
        %760 = vmatpush.bf16.msra.mxu0 0
        %761 = vmatpush.bf16.msra.mxu0 0
        %762 = vmatpush.bf16.msra.mxu0 0
        %763 = vmatpush.bf16.msra.mxu0 0
        %764 = vmatpush.bf16.msra.mxu0 0
        %765 = vmatpush.bf16.msra.mxu0 0
        %766 = vmatpush.bf16.msra.mxu0 0
        %767 = vmatpush.bf16.msra.mxu0 %v758
        %768 = vmatmul.bf16.gmra.mxu0 %v755
        %v769 = vpop.f32.mrf.mxu0
        %v770 = vadd.f32 0.0, %v769
        %v771 = vpop.f32.mrf.mxu0
        %772 = vdwg.mxu0
        %774 = vrot.lane.b32.xlu0 %v770, 24
        %v775 = vpop.permute.xlu0 %774
        %vm777 = vcmask 261312
        %778 = vst.msk [vmem:[#allocation2] sm:$0xff] %vm777, %v775
        %v779 = vld [vmem:[#allocation2] sm:$0xff]
        %v780 = vpack.c.bf16 %v779, %v779
        %v781 = vld [vmem:[#allocation8] sm:$0xf]
        %v782 = vld [vmem:[#allocation8 + $0x4] sm:$0xf]
        %v783 = vld [vmem:[#allocation8 + $0x8] sm:$0xf]
        %v784 = vld [vmem:[#allocation8 + $0xc] sm:$0xf]
        %v785 = vld [vmem:[%s3] sm:$0x1]
        %v787 = vperm.slane %v785, 0
        %v793 = vunpack.c.l.b16 %v781
        %v794 = vunpack.c.l.b16 %v782
        %v795 = vunpack.c.l.b16 %v783
        %v796 = vunpack.c.l.b16 %v784
        %v797 = vpack.c.b16 %v794, %v793
        %v798 = vpack.c.b16 %v796, %v795
        %v802 = vsel %vm349, %v780, 0
        %804 = vmatpush.bf16.msra.mxu0 0
        %805 = vmatpush.bf16.msra.mxu0 0
        %806 = vmatpush.bf16.msra.mxu0 0
        %807 = vmatpush.bf16.msra.mxu0 0
        %808 = vmatpush.bf16.msra.mxu0 0
        %809 = vmatpush.bf16.msra.mxu0 0
        %810 = vmatpush.bf16.msra.mxu0 %v798
        %811 = vmatpush.bf16.msra.mxu0 %v797
        %812 = vmatmul.bf16.gmra.mxu0 %v802
        %v813 = vpop.f32.mrf.mxu0
        %v814 = vadd.f32 %v787, %v813
        %v815 = vpop.f32.mrf.mxu0
        %816 = vdwg.mxu0
        %817 = vst.msk [vmem:[%s330] sm:$0xff] %vm349, %v814
        %s818 = sand.u32 %s164, 1
        %s819 = scalar_lea.sflag [#allocation5], %s818
        %s820 = sand.u32 %s164, 1
        %s821 = smul.addr %s820, 8
        %s822 = scalar_lea.vmem [#allocation12], %s821
        // Predicated region
        $region65: #{tpu_custom_call.1} parent=43 // pred_check
          %p823 = pneg %p174
        $region66: #{tpu_custom_call.1} parent=43 // pred_check_branch
          %825 = sbr.rel (%p823) target = $region68
        $region67: #{tpu_custom_call.1} parent=43 // pred_region
          %827 = vsyncadd %s819, 0
          %s828 = smul.addr %s25, 8
          %s829 = scalar_lea.hbm %s6, %s828
          %s831 = sshll.u32 %s822, 4
          %s832 = int_to_ptr.vmem [resolvable:$true] %s831
          %s833 = sshll.u32 %s829, 4
          %s834 = int_to_ptr.hbm [resolvable:$true] %s833
          %836 = dma.vmem_to_hbm [thread:$0]  %s832, 128, %s834, %s819
        $region68: #{tpu_custom_call.1} parent=43 // pred_fallthru
          _
      $region44: #{tpu_custom_call.1} parent=5 // pred_fallthru
        _
      %p837 = scmp.le.s32.totalorder 2, %s20
      // Predicated region
      $region69: #{tpu_custom_call.1} parent=5 // pred_check
        %p838 = pneg %p837
      $region70: #{tpu_custom_call.1} parent=5 // pred_check_branch
        %840 = sbr.rel (%p838) target = $region72
      $region71: #{tpu_custom_call.1} parent=5 // pred_region
        %s841 = ssub.s32 %s20, 2
        // Predicated region
        $region73: #{tpu_custom_call.1} parent=71 // pred_check
          %p842 = pneg %p180
        $region74: #{tpu_custom_call.1} parent=71 // pred_check_branch
          %844 = sbr.rel (%p842) target = $region76
        $region75: #{tpu_custom_call.1} parent=71 // pred_region
          %s845 = sand.u32 %s165, 1
          %s846 = scalar_lea.sflag [#allocation5], %s845
          %s847 = sand.u32 %s165, 1
          %s848 = smul.addr %s847, 8
          %s849 = scalar_lea.vmem [#allocation12], %s848
          %851 = dma.done %s846, 128
        $region76: #{tpu_custom_call.1} parent=71 // pred_fallthru
          _
      $region72: #{tpu_custom_call.1} parent=5 // pred_fallthru
        _
    $region6: #{tpu_custom_call.1} parent=1 // loop_footer
      %s24 = sadd.s32 1, %s20
    $region7: #{tpu_custom_call.1} parent=1 // loop_footer_branch
      %19 = sbr.rel target = $region3
    $region8: #{tpu_custom_call.1} parent=1 // loop_exit
      _
    %852 = vsyncpa [#allocation4], 1
    %s853 = scalar_lea.sflag [#allocation4], 1
    %854 = vsyncpa %s853, 1
    %855 = vsyncpa [#allocation7], 1
    %856 = vsyncpa [#allocation10], 1
    %857 = vsyncpa [#allocation5], 1
    %s858 = scalar_lea.sflag [#allocation5], 1
    %859 = vsyncpa %s858, 1

// kernel: tpu_custom_call.1
$region0: #{tpu_custom_call.1}
  #allocation0 [shape = 'u32[]', space=smem, size = 0x4, offset = 0x4, fixed_abs, tag = 'smem constant byte address 0x4 - core index']
  #allocation1 [shape = 'u32[72,128]{1,0:T(1,128)}', space=vmem, size = 0x9000, scoped, tag = 'internal scratch']
  #allocation2 [shape = 'f32[8,32]{1,0:T(8,128)}', space=vmem, size = 0x1000, scoped, tag = 'scratch operand']
  %s0 = inlined_call_operand.hbm [shape: bf16[2,8,32], index: 0, kind: input, shape index: {}]
  %s1 = inlined_call_operand.hbm [shape: bf16[32,96], index: 1, kind: input, shape index: {}]
  %s2 = inlined_call_operand.hbm [shape: bf16[32,32], index: 2, kind: input, shape index: {}]
  %s3 = inlined_call_operand.vmem [shape: f32[1,32], index: 3, kind: input, shape index: {}]
  %s4 = inlined_call_operand.hbm [shape: f32[16,16], index: 4, kind: input, shape index: {}]
  %s5 = inlined_call_operand.hbm [shape: f32[16,16], index: 5, kind: input, shape index: {}]
  %s6 = inlined_call_operand.hbm [shape: f32[2,8,32], index: 6, kind: output, shape index: {}]
  %s7 = sld [smem:[#allocation0]]
  $region77: #{tpu_custom_call.1} parent=0
    _
  %s9 = ssub.s32 1, %s7
  %s10 = scalar_select 0, %s9, %s7
  $region1: #{tpu_custom_call.1} parent=0
    #allocation3 [shape = 'u8[4096]{0}', space=vmem, size = 0x1000, scoped, tag = 'input window, operand 0']
    #allocation4 [shape = 's32[2]{0}', space=sflag, size = 0x8, scoped, tag = 'scoped memory for tpu_custom_call.1']
    #allocation5 [shape = 's32[2]{0}', space=sflag, size = 0x8, scoped, tag = 'scoped memory for tpu_custom_call.1']
    #allocation6 [shape = 'u8[8192]{0}', space=vmem, size = 0x2000, scoped, tag = 'input window, operand 1, single buffered']
    #allocation7 [shape = 's32[1]{0}', space=sflag, size = 0x4, scoped, tag = 'scoped memory for tpu_custom_call.1']
    #allocation8 [shape = 'u8[8192]{0}', space=vmem, size = 0x2000, scoped, tag = 'input window, operand 2, single buffered']
    #allocation9 [shape = 'u8[4096]{0}', space=vmem, size = 0x1000, scoped, tag = 'input window, operand 4, single buffered']
    #allocation10 [shape = 's32[1]{0}', space=sflag, size = 0x4, scoped, tag = 'scoped memory for tpu_custom_call.1']
    #allocation11 [shape = 'u8[4096]{0}', space=vmem, size = 0x1000, scoped, tag = 'input window, operand 5, single buffered']
    #allocation12 [shape = 'u8[8192]{0}', space=vmem, size = 0x2000, scoped, tag = 'output window, operand 0']
    %11 = vsyncpa [#allocation4], 0
    %s12 = scalar_lea.sflag [#allocation4], 1
    %13 = vsyncpa %s12, 0
    %14 = vsyncpa [#allocation7], 0
    %15 = vsyncpa [#allocation10], 0
    %16 = vsyncpa [#allocation5], 0
    %s17 = scalar_lea.sflag [#allocation5], 1
    %18 = vsyncpa %s17, 0
    loop: start=0, step=1, limit=4
    $region2: #{tpu_custom_call.1} parent=1 // loop_pre_header
      _
    $region3: #{tpu_custom_call.1} parent=1 // loop_header
      %s20 = sphi 0, %s24
      %p21 = scmp.ge.s32.totalorder %s20, 4
      %s30 = sphi 0, %s32
      %s33 = sphi 0, %s30
      %s34 = sphi 0, %s33
      %s50 = sphi 0, %s34
      %s54 = sphi 0, %s54
      %s56 = sphi 0, %s54
      %s57 = sphi 0, %s56
      %s71 = sphi 0, %s57
      %s75 = sphi 0, %s75
      %s77 = sphi 0, %s75
      %s78 = sphi 0, %s77
      %s92 = sphi 0, %s78
      %s96 = sphi 0, %s96
      %s98 = sphi 0, %s96
      %s99 = sphi 0, %s98
      %s113 = sphi 0, %s99
      %s117 = sphi 0, %s117
      %s119 = sphi 0, %s117
      %s120 = sphi 0, %s119
      %s134 = sphi 0, %s120
      %s138 = sphi 0, %s138
      %s140 = sphi 0, %s138
      %s141 = sphi 0, %s140
      %s155 = sphi 0, %s141
      %s161 = sphi 0, %s163
      %s164 = sphi 0, %s161
      %s165 = sphi 0, %s164
      %s181 = sphi 0, %s165
    $region4: #{tpu_custom_call.1} parent=1 // loop_header_branch
      %23 = sbr.rel (%p21) target = $region8
    $region5: #{tpu_custom_call.1} parent=1 // loop_body
      %s25 = ssub.s32 %s20, 1
      %s26 = ssub.s32 %s20, 2
      %s27 = sadd.s32 %s20, 1
      %s28 = ssub.s32 %s20, %s27
      %p29 = scmp.eq.s32.totalorder %s28, 0
      %s31 = sadd.s32 %s30, 1
      %s32 = scalar_select %p29, %s30, %s31
      %p35 = pneg %p29
      %p36 = scmp.eq.s32.totalorder %s20, 1
      %p37 = por %p35, %p36
      %p38 = scmp.ne.s32.totalorder %s30, %s33
      %p39 = scmp.eq.s32.totalorder %s20, 0
      %p40 = por %p38, %p39
      %p41 = scmp.ne.s32.totalorder %s30, %s33
      %p42 = scmp.eq.s32.totalorder %s25, 1
      %p43 = por %p41, %p42
      %p44 = scmp.ne.s32.totalorder %s33, %s34
      %p45 = scmp.eq.s32.totalorder %s25, 0
      %p46 = por %p44, %p45
      %p47 = scmp.ne.s32.totalorder %s33, %s34
      %p48 = scmp.eq.s32.totalorder %s26, 1
      %p49 = por %p47, %p48
      %p51 = scmp.ne.s32.totalorder %s34, %s50
      %p52 = scmp.eq.s32.totalorder %s26, 0
      %p53 = por %p51, %p52
      %s55 = sadd.s32 %s54, 1
      %p58 = scmp.eq.s32.totalorder %s20, 1
      %p59 = scmp.ne.s32.totalorder %s54, %s56
      %p60 = scmp.eq.s32.totalorder %s20, 0
      %p61 = por %p59, %p60
      %p62 = scmp.ne.s32.totalorder %s54, %s56
      %p63 = scmp.eq.s32.totalorder %s25, 1
      %p64 = por %p62, %p63
      %p65 = scmp.ne.s32.totalorder %s56, %s57
      %p66 = scmp.eq.s32.totalorder %s25, 0
      %p67 = por %p65, %p66
      %p68 = scmp.ne.s32.totalorder %s56, %s57
      %p69 = scmp.eq.s32.totalorder %s26, 1
      %p70 = por %p68, %p69
      %p72 = scmp.ne.s32.totalorder %s57, %s71
      %p73 = scmp.eq.s32.totalorder %s26, 0
      %p74 = por %p72, %p73
      %s76 = sadd.s32 %s75, 1
      %p79 = scmp.eq.s32.totalorder %s20, 1
      %p80 = scmp.ne.s32.totalorder %s75, %s77
      %p81 = scmp.eq.s32.totalorder %s20, 0
      %p82 = por %p80, %p81
      %p83 = scmp.ne.s32.totalorder %s75, %s77
      %p84 = scmp.eq.s32.totalorder %s25, 1
      %p85 = por %p83, %p84
      %p86 = scmp.ne.s32.totalorder %s77, %s78
      %p87 = scmp.eq.s32.totalorder %s25, 0
      %p88 = por %p86, %p87
      %p89 = scmp.ne.s32.totalorder %s77, %s78
      %p90 = scmp.eq.s32.totalorder %s26, 1
      %p91 = por %p89, %p90
      %p93 = scmp.ne.s32.totalorder %s78, %s92
      %p94 = scmp.eq.s32.totalorder %s26, 0
      %p95 = por %p93, %p94
      %s97 = sadd.s32 %s96, 1
      %p100 = scmp.eq.s32.totalorder %s20, 1
      %p101 = scmp.ne.s32.totalorder %s96, %s98
      %p102 = scmp.eq.s32.totalorder %s20, 0
      %p103 = por %p101, %p102
      %p104 = scmp.ne.s32.totalorder %s96, %s98
      %p105 = scmp.eq.s32.totalorder %s25, 1
      %p106 = por %p104, %p105
      %p107 = scmp.ne.s32.totalorder %s98, %s99
      %p108 = scmp.eq.s32.totalorder %s25, 0
      %p109 = por %p107, %p108
      %p110 = scmp.ne.s32.totalorder %s98, %s99
      %p111 = scmp.eq.s32.totalorder %s26, 1
      %p112 = por %p110, %p111
      %p114 = scmp.ne.s32.totalorder %s99, %s113
      %p115 = scmp.eq.s32.totalorder %s26, 0
      %p116 = por %p114, %p115
      %s118 = sadd.s32 %s117, 1
      %p121 = scmp.eq.s32.totalorder %s20, 1
      %p122 = scmp.ne.s32.totalorder %s117, %s119
      %p123 = scmp.eq.s32.totalorder %s20, 0
      %p124 = por %p122, %p123
      %p125 = scmp.ne.s32.totalorder %s117, %s119
      %p126 = scmp.eq.s32.totalorder %s25, 1
      %p127 = por %p125, %p126
      %p128 = scmp.ne.s32.totalorder %s119, %s120
      %p129 = scmp.eq.s32.totalorder %s25, 0
      %p130 = por %p128, %p129
      %p131 = scmp.ne.s32.totalorder %s119, %s120
      %p132 = scmp.eq.s32.totalorder %s26, 1
      %p133 = por %p131, %p132
      %p135 = scmp.ne.s32.totalorder %s120, %s134
      %p136 = scmp.eq.s32.totalorder %s26, 0
      %p137 = por %p135, %p136
      %s139 = sadd.s32 %s138, 1
      %p142 = scmp.eq.s32.totalorder %s20, 1
      %p143 = scmp.ne.s32.totalorder %s138, %s140
      %p144 = scmp.eq.s32.totalorder %s20, 0
      %p145 = por %p143, %p144
      %p146 = scmp.ne.s32.totalorder %s138, %s140
      %p147 = scmp.eq.s32.totalorder %s25, 1
      %p148 = por %p146, %p147
      %p149 = scmp.ne.s32.totalorder %s140, %s141
      %p150 = scmp.eq.s32.totalorder %s25, 0
      %p151 = por %p149, %p150
      %p152 = scmp.ne.s32.totalorder %s140, %s141
      %p153 = scmp.eq.s32.totalorder %s26, 1
      %p154 = por %p152, %p153
      %p156 = scmp.ne.s32.totalorder %s141, %s155
      %p157 = scmp.eq.s32.totalorder %s26, 0
      %p158 = por %p156, %p157
      %s159 = ssub.s32 %s20, %s27
      %p160 = scmp.eq.s32.totalorder %s159, 0
      %s162 = sadd.s32 %s161, 1
      %s163 = scalar_select %p160, %s161, %s162
      %p166 = pneg %p160
      %p167 = scmp.eq.s32.totalorder %s20, 1
      %p168 = por %p166, %p167
      %p169 = scmp.ne.s32.totalorder %s161, %s164
      %p170 = scmp.eq.s32.totalorder %s20, 0
      %p171 = por %p169, %p170
      %p172 = scmp.ne.s32.totalorder %s161, %s164
      %p173 = scmp.eq.s32.totalorder %s25, 1
      %p174 = por %p172, %p173
      %p175 = scmp.ne.s32.totalorder %s164, %s165
      %p176 = scmp.eq.s32.totalorder %s25, 0
      %p177 = por %p175, %p176
      %p178 = scmp.ne.s32.totalorder %s164, %s165
      %p179 = scmp.eq.s32.totalorder %s26, 1
      %p180 = por %p178, %p179
      %p182 = scmp.ne.s32.totalorder %s165, %s181
      %p183 = scmp.eq.s32.totalorder %s26, 0
      %p184 = por %p182, %p183
      %p185 = scmp.le.s32.totalorder 1, %s20
      %p186 = scmp.lt.s32.totalorder %s20, 3
      %p187 = pnand %p185, %p186
      %p188 = pneg %p187
      // Predicated region
      $region9: #{tpu_custom_call.1} parent=5 // pred_check
        _
      $region10: #{tpu_custom_call.1} parent=5 // pred_check_branch
        %190 = sbr.rel (%p187) target = $region12
      $region11: #{tpu_custom_call.1} parent=5 // pred_region
        %s191 = ssub.s32 %s20, 1
        // Predicated region
        $region13: #{tpu_custom_call.1} parent=11 // pred_check
          %p192 = pneg %p67
        $region14: #{tpu_custom_call.1} parent=11 // pred_check_branch
          %194 = sbr.rel (%p192) target = $region16
        $region15: #{tpu_custom_call.1} parent=11 // pred_region
          %196 = vsyncadd [#allocation7], 0
          %s197 = sshll.u32 %s1, 4
          %s198 = int_to_ptr.hbm [resolvable:$true] %s197
          %s199 = sshll.u32 [#allocation6], 4
          %s200 = int_to_ptr.vmem [resolvable:$true] %s199
          %205 = dma.hbm_to_vmem [thread:$0]  %s198, 256, %s200, [#allocation7], 64, 64, 4
        $region16: #{tpu_custom_call.1} parent=11 // pred_fallthru
          _
        // Predicated region
        $region17: #{tpu_custom_call.1} parent=11 // pred_check
          %p206 = pneg %p88
        $region18: #{tpu_custom_call.1} parent=11 // pred_check_branch
          %208 = sbr.rel (%p206) target = $region20
        $region19: #{tpu_custom_call.1} parent=11 // pred_region
          %210 = vsyncadd [#allocation7], 0
          %s211 = sshll.u32 %s2, 4
          %s212 = int_to_ptr.hbm [resolvable:$true] %s211
          %s213 = sshll.u32 [#allocation8], 4
          %s214 = int_to_ptr.vmem [resolvable:$true] %s213
          %219 = dma.hbm_to_vmem [thread:$0]  %s212, 256, %s214, [#allocation7], 64, 64, 4
        $region20: #{tpu_custom_call.1} parent=11 // pred_fallthru
          _
        // Predicated region
        $region21: #{tpu_custom_call.1} parent=11 // pred_check
          %p220 = pneg %p109
        $region22: #{tpu_custom_call.1} parent=11 // pred_check_branch
          %222 = sbr.rel (%p220) target = $region24
        $region23: #{tpu_custom_call.1} parent=11 // pred_region
          _
        $region24: #{tpu_custom_call.1} parent=11 // pred_fallthru
          _
        // Predicated region
        $region25: #{tpu_custom_call.1} parent=11 // pred_check
          %p223 = pneg %p130
        $region26: #{tpu_custom_call.1} parent=11 // pred_check_branch
          %225 = sbr.rel (%p223) target = $region28
        $region27: #{tpu_custom_call.1} parent=11 // pred_region
          %227 = vsyncadd [#allocation10], 0
          %s229 = sshll.u32 %s4, 4
          %s230 = int_to_ptr.hbm [resolvable:$true] %s229
          %s231 = sshll.u32 [#allocation9], 4
          %s232 = int_to_ptr.vmem [resolvable:$true] %s231
          %234 = dma.hbm_to_vmem [thread:$0]  %s230, 128, %s232, [#allocation10]
        $region28: #{tpu_custom_call.1} parent=11 // pred_fallthru
          _
        // Predicated region
        $region29: #{tpu_custom_call.1} parent=11 // pred_check
          %p235 = pneg %p151
        $region30: #{tpu_custom_call.1} parent=11 // pred_check_branch
          %237 = sbr.rel (%p235) target = $region32
        $region31: #{tpu_custom_call.1} parent=11 // pred_region
          %239 = vsyncadd [#allocation10], 0
          %s241 = sshll.u32 %s5, 4
          %s242 = int_to_ptr.hbm [resolvable:$true] %s241
          %s243 = sshll.u32 [#allocation11], 4
          %s244 = int_to_ptr.vmem [resolvable:$true] %s243
          %246 = dma.hbm_to_vmem [thread:$0]  %s242, 128, %s244, [#allocation10]
        $region32: #{tpu_custom_call.1} parent=11 // pred_fallthru
          _
      $region12: #{tpu_custom_call.1} parent=5 // pred_fallthru
        _
      %p247 = scmp.lt.s32.totalorder %s20, 2
      // Predicated region
      $region33: #{tpu_custom_call.1} parent=5 // pred_check
        %p248 = pneg %p247
      $region34: #{tpu_custom_call.1} parent=5 // pred_check_branch
        %250 = sbr.rel (%p248) target = $region36
      $region35: #{tpu_custom_call.1} parent=5 // pred_region
        // Predicated region
        $region37: #{tpu_custom_call.1} parent=35 // pred_check
          %p251 = pneg %p40
        $region38: #{tpu_custom_call.1} parent=35 // pred_check_branch
          %253 = sbr.rel (%p251) target = $region40
        $region39: #{tpu_custom_call.1} parent=35 // pred_region
          %s254 = sand.u32 %s30, 1
          %s255 = scalar_lea.sflag [#allocation4], %s254
          %s256 = sand.u32 %s30, 1
          %s257 = smul.addr %s256, 4
          %s258 = scalar_lea.vmem [#allocation3], %s257
          %260 = vsyncadd %s255, 0
          %s261 = smul.addr %s20, 4
          %s262 = scalar_lea.hbm %s0, %s261
          %s264 = sshll.u32 %s262, 4
          %s265 = int_to_ptr.hbm [resolvable:$true] %s264
          %s266 = sshll.u32 %s258, 4
          %s267 = int_to_ptr.vmem [resolvable:$true] %s266
          %269 = dma.hbm_to_vmem [thread:$0]  %s265, 64, %s267, %s255
        $region40: #{tpu_custom_call.1} parent=35 // pred_fallthru
          _
      $region36: #{tpu_custom_call.1} parent=5 // pred_fallthru
        _
      %p270 = scmp.le.s32.totalorder 1, %s20
      %p271 = scmp.lt.s32.totalorder %s20, 3
      %p272 = pnand %p270, %p271
      %p273 = pneg %p272
      // Predicated region
      $region41: #{tpu_custom_call.1} parent=5 // pred_check
        _
      $region42: #{tpu_custom_call.1} parent=5 // pred_check_branch
        %275 = sbr.rel (%p272) target = $region44
      $region43: #{tpu_custom_call.1} parent=5 // pred_region
        %s276 = ssub.s32 %s20, 1
        %s277 = sand.u32 %s33, 1
        %s278 = scalar_lea.sflag [#allocation4], %s277
        %s279 = sand.u32 %s33, 1
        %s280 = smul.addr %s279, 4
        %s281 = scalar_lea.vmem [#allocation3], %s280
        // Predicated region
        $region45: #{tpu_custom_call.1} parent=43 // pred_check
          %p282 = pneg %p46
        $region46: #{tpu_custom_call.1} parent=43 // pred_check_branch
          %284 = sbr.rel (%p282) target = $region48
        $region47: #{tpu_custom_call.1} parent=43 // pred_region
          %286 = dma.done %s278, 64
        $region48: #{tpu_custom_call.1} parent=43 // pred_fallthru
          _
        // Predicated region
        $region49: #{tpu_custom_call.1} parent=43 // pred_check
          %p287 = pneg %p67
        $region50: #{tpu_custom_call.1} parent=43 // pred_check_branch
          %289 = sbr.rel (%p287) target = $region52
        $region51: #{tpu_custom_call.1} parent=43 // pred_region
          %291 = dma.done [#allocation7], 256
        $region52: #{tpu_custom_call.1} parent=43 // pred_fallthru
          _
        // Predicated region
        $region53: #{tpu_custom_call.1} parent=43 // pred_check
          %p292 = pneg %p88
        $region54: #{tpu_custom_call.1} parent=43 // pred_check_branch
          %294 = sbr.rel (%p292) target = $region56
        $region55: #{tpu_custom_call.1} parent=43 // pred_region
          %296 = dma.done [#allocation7], 256
        $region56: #{tpu_custom_call.1} parent=43 // pred_fallthru
          _
        // Predicated region
        $region57: #{tpu_custom_call.1} parent=43 // pred_check
          %p297 = pneg %p130
        $region58: #{tpu_custom_call.1} parent=43 // pred_check_branch
          %299 = sbr.rel (%p297) target = $region60
        $region59: #{tpu_custom_call.1} parent=43 // pred_region
          %301 = dma.done [#allocation10], 128
        $region60: #{tpu_custom_call.1} parent=43 // pred_fallthru
          _
        // Predicated region
        $region61: #{tpu_custom_call.1} parent=43 // pred_check
          %p302 = pneg %p151
        $region62: #{tpu_custom_call.1} parent=43 // pred_check_branch
          %304 = sbr.rel (%p302) target = $region64
        $region63: #{tpu_custom_call.1} parent=43 // pred_region
          %306 = dma.done [#allocation10], 128
        $region64: #{tpu_custom_call.1} parent=43 // pred_fallthru
          _
        %s307 = sand.u32 %s33, 1
        %s308 = scalar_lea.sflag [#allocation4], %s307
        %s309 = sand.u32 %s33, 1
        %s310 = smul.addr %s309, 4
        %s311 = scalar_lea.vmem [#allocation3], %s310
        %p312 = pneg %p46
        %p313 = pneg %p43
        %p314 = pneg %p67
        %p315 = pneg %p64
        %p316 = pneg %p88
        %p317 = pneg %p85
        %p318 = pneg %p109
        %p319 = pneg %p106
        %p320 = pneg %p130
        %p321 = pneg %p127
        %p322 = pneg %p151
        %p323 = pneg %p148
        %p324 = pneg %p177
        %p325 = pneg %p174
        %s326 = sand.u32 %s164, 1
        %s327 = scalar_lea.sflag [#allocation5], %s326
        %s328 = sand.u32 %s164, 1
        %s329 = smul.addr %s328, 8
        %s330 = scalar_lea.vmem [#allocation12], %s329
        %v332 = vld [vmem:[%s281] sm:$0xf]
        %v333 = vld [vmem:[#allocation6] sm:$0xf]
        %v334 = vld [vmem:[#allocation6 + $0x4] sm:$0xf]
        %v335 = vld [vmem:[#allocation6 + $0x8] sm:$0xf]
        %v336 = vld [vmem:[#allocation6 + $0xc] sm:$0xf]
        %v341 = vunpack.c.l.b16 %v333
        %v342 = vunpack.c.l.b16 %v334
        %v343 = vunpack.c.l.b16 %v335
        %v344 = vunpack.c.l.b16 %v336
        %v345 = vpack.c.b16 %v342, %v341
        %v346 = vpack.c.b16 %v344, %v343
        %vm349 = vcmask 261120
        %v351 = vsel %vm349, %v332, 0
        %353 = vmatpush.bf16.msra.mxu0 0
        %354 = vmatpush.bf16.msra.mxu0 0
        %355 = vmatpush.bf16.msra.mxu0 0
        %356 = vmatpush.bf16.msra.mxu0 0
        %357 = vmatpush.bf16.msra.mxu0 0
        %358 = vmatpush.bf16.msra.mxu0 0
        %359 = vmatpush.bf16.msra.mxu0 %v346
        %360 = vmatpush.bf16.msra.mxu0 %v345
        %361 = vmatmul.bf16.gmra.mxu0 %v351
        %v362 = vpop.f32.mrf.mxu0
        %v363 = vadd.f32 0.0, %v362
        %v364 = vpop.f32.mrf.mxu0
        %365 = vdwg.mxu0
        %v366 = vld [vmem:[#allocation9] sm:$0xff]
        %v367 = vld [vmem:[#allocation11] sm:$0xff]
        %v368 = vmul.f32 %v363, %v366
        %370 = vrot.lane.b32.xlu0 %v367, 16
        %v371 = vpop.permute.xlu0 %370
        %v373 = vmul.f32 %v363, %v371
        %375 = vrot.lane.b32.xlu0 %v373, 112
        %v376 = vpop.permute.xlu0 %375
        %v378 = vsub.f32 %v368, %v376
        %v379 = vmul.f32 %v363, %v367
        %381 = vrot.lane.b32.xlu0 %v366, 16
        %v382 = vpop.permute.xlu0 %381
        %v384 = vmul.f32 %v363, %v382
        %386 = vrot.lane.b32.xlu0 %v384, 112
        %v387 = vpop.permute.xlu0 %386
        %v389 = vadd.f32 %v379, %v387
        %390 = vrot.lane.b32.xlu0 %v366, 32
        %v391 = vpop.permute.xlu0 %390
        %v393 = vmul.f32 %v363, %v391
        %394 = vrot.lane.b32.xlu0 %v367, 48
        %v395 = vpop.permute.xlu0 %394
        %v397 = vmul.f32 %v363, %v395
        %399 = vrot.lane.b32.xlu0 %v397, 112
        %v400 = vpop.permute.xlu0 %399
        %v402 = vsub.f32 %v393, %v400
        %403 = vrot.lane.b32.xlu0 %v367, 32
        %v404 = vpop.permute.xlu0 %403
        %v406 = vmul.f32 %v363, %v404
        %407 = vrot.lane.b32.xlu0 %v366, 48
        %v408 = vpop.permute.xlu0 %407
        %v410 = vmul.f32 %v363, %v408
        %412 = vrot.lane.b32.xlu0 %v410, 112
        %v413 = vpop.permute.xlu0 %412
        %v415 = vadd.f32 %v406, %v413
        %v416 = vpack.c.bf16 %v378, %v378
        %v417 = vpack.c.bf16 %v389, %v389
        %v418 = vpack.c.bf16 %v402, %v402
        %v419 = vpack.c.bf16 %v415, %v415
        %v420 = vpack.c.bf16 %v363, %v363
        %v421 = vlaneseq
        %v422 = vshrl.u32 %v421, 7
        %v423 = vlaneseq
        %v424 = vand.u32 %v423, 127
        %vm425 = vcmp.ge.s32.totalorder %v422, %v424
        %v427 = vunpack.c.l.b16 %v419
        %v428 = vpack.c.b16 %v427, %v427
        %429 = vrot.lane.b32.xlu0 %v428, 96
        %v430 = vpop.permute.xlu0 %429
        %vm431 = vcmask 31744
        %v433 = vsel %vm431, %v417, 0
        %v436 = vsel %vm431, %v430, 0
        %438 = vmatpush.bf16.xpose.msra.mxu0 0
        %439 = vmatpush.bf16.xpose.msra.mxu0 0
        %440 = vmatpush.bf16.xpose.msra.mxu0 0
        %441 = vmatpush.bf16.xpose.msra.mxu0 0
        %442 = vmatpush.bf16.xpose.msra.mxu0 0
        %443 = vmatpush.bf16.xpose.msra.mxu0 0
        %444 = vmatpush.bf16.xpose.msra.mxu0 0
        %445 = vmatpush.bf16.xpose.msra.mxu0 %v436
        %446 = vmatmul.bf16.gmra.mxu0 %v433
        %v447 = vpop.f32.mrf.mxu0
        %v448 = vadd.f32 0.0, %v447
        %v449 = vpop.f32.mrf.mxu0
        %450 = vdwg.mxu0
        %v452 = vunpack.c.l.b16 %v418
        %v453 = vpack.c.b16 %v452, %v452
        %454 = vrot.lane.b32.xlu0 %v453, 96
        %v455 = vpop.permute.xlu0 %454
        %v457 = vsel %vm431, %v416, 0
        %v460 = vsel %vm431, %v455, 0
        %462 = vmatpush.bf16.xpose.msra.mxu0 0
        %463 = vmatpush.bf16.xpose.msra.mxu0 0
        %464 = vmatpush.bf16.xpose.msra.mxu0 0
        %465 = vmatpush.bf16.xpose.msra.mxu0 0
        %466 = vmatpush.bf16.xpose.msra.mxu0 0
        %467 = vmatpush.bf16.xpose.msra.mxu0 0
        %468 = vmatpush.bf16.xpose.msra.mxu0 0
        %469 = vmatpush.bf16.xpose.msra.mxu0 %v460
        %470 = vmatmul.bf16.gmra.mxu0 %v457
        %v471 = vpop.f32.mrf.mxu0
        %v472 = vadd.f32 %v448, %v471
        %v473 = vpop.f32.mrf.mxu0
        %474 = vdwg.mxu0
        %v475 = vsel %vm425, %v472, -1e+30
        %vm476 = vcmask 64512
        %v477 = vsel %vm476, %v475, -inf
        %478 = vmax.xlane.f32.xlu0 %v477
        %v479 = vpop.xlane.xlu0 %478
        %v480 = vsub.f32 %v475, %v479
        %v481 = vmul.f32 %v480, 1.442695
        %v482 = vpow.pop %v481
        %v483 = vsel %vm476, %v482, 0.0
        %484 = vadd.xlane.f32.xlu0 %v483
        %v485 = vpop.xlane.xlu0 %484
        %v486 = vrcp.pop %v485
        %v487 = vmul.f32 %v482, %v486
        %v488 = vpack.c.bf16 %v487, %v487
        %v490 = vunpack.c.l.b16 %v420
        %v491 = vpack.c.b16 %v490, %v490
        %492 = vrot.lane.b32.xlu0 %v491, 64
        %v493 = vpop.permute.xlu0 %492
        %v495 = vsel %vm476, %v488, 0
        %vm497 = vcmask 1043456
        %v499 = vsel %vm497, %v493, 0
        %501 = vmatpush.bf16.msra.mxu0 0
        %502 = vmatpush.bf16.msra.mxu0 0
        %503 = vmatpush.bf16.msra.mxu0 0
        %504 = vmatpush.bf16.msra.mxu0 0
        %505 = vmatpush.bf16.msra.mxu0 0
        %506 = vmatpush.bf16.msra.mxu0 0
        %507 = vmatpush.bf16.msra.mxu0 0
        %508 = vmatpush.bf16.msra.mxu0 %v499
        %509 = vmatmul.bf16.gmra.mxu0 %v495
        %v510 = vpop.f32.mrf.mxu0
        %v511 = vadd.f32 0.0, %v510
        %v512 = vpop.f32.mrf.mxu0
        %513 = vdwg.mxu0
        %514 = vst.msk [vmem:[#allocation2] sm:$0xff] %vm476, %v511
        %v516 = vunpack.c.l.b16 %v417
        %v517 = vpack.c.b16 %v516, %v516
        %518 = vrot.lane.b32.xlu0 %v517, 124
        %v519 = vpop.permute.xlu0 %518
        %520 = vrot.lane.b32.xlu0 %v428, 92
        %v521 = vpop.permute.xlu0 %520
        %v523 = vsel %vm431, %v519, 0
        %v526 = vsel %vm431, %v521, 0
        %528 = vmatpush.bf16.xpose.msra.mxu0 0
        %529 = vmatpush.bf16.xpose.msra.mxu0 0
        %530 = vmatpush.bf16.xpose.msra.mxu0 0
        %531 = vmatpush.bf16.xpose.msra.mxu0 0
        %532 = vmatpush.bf16.xpose.msra.mxu0 0
        %533 = vmatpush.bf16.xpose.msra.mxu0 0
        %534 = vmatpush.bf16.xpose.msra.mxu0 0
        %535 = vmatpush.bf16.xpose.msra.mxu0 %v526
        %536 = vmatmul.bf16.gmra.mxu0 %v523
        %v537 = vpop.f32.mrf.mxu0
        %v538 = vadd.f32 0.0, %v537
        %v539 = vpop.f32.mrf.mxu0
        %540 = vdwg.mxu0
        %v542 = vunpack.c.l.b16 %v416
        %v543 = vpack.c.b16 %v542, %v542
        %544 = vrot.lane.b32.xlu0 %v543, 124
        %v545 = vpop.permute.xlu0 %544
        %546 = vrot.lane.b32.xlu0 %v453, 92
        %v547 = vpop.permute.xlu0 %546
        %v549 = vsel %vm431, %v545, 0
        %v552 = vsel %vm431, %v547, 0
        %554 = vmatpush.bf16.xpose.msra.mxu0 0
        %555 = vmatpush.bf16.xpose.msra.mxu0 0
        %556 = vmatpush.bf16.xpose.msra.mxu0 0
        %557 = vmatpush.bf16.xpose.msra.mxu0 0
        %558 = vmatpush.bf16.xpose.msra.mxu0 0
        %559 = vmatpush.bf16.xpose.msra.mxu0 0
        %560 = vmatpush.bf16.xpose.msra.mxu0 0
        %561 = vmatpush.bf16.xpose.msra.mxu0 %v552
        %562 = vmatmul.bf16.gmra.mxu0 %v549
        %v563 = vpop.f32.mrf.mxu0
        %v564 = vadd.f32 %v538, %v563
        %v565 = vpop.f32.mrf.mxu0
        %566 = vdwg.mxu0
        %v567 = vsel %vm425, %v564, -1e+30
        %v568 = vsel %vm476, %v567, -inf
        %569 = vmax.xlane.f32.xlu0 %v568
        %v570 = vpop.xlane.xlu0 %569
        %v571 = vsub.f32 %v567, %v570
        %v572 = vmul.f32 %v571, 1.442695
        %v573 = vpow.pop %v572
        %v574 = vsel %vm476, %v573, 0.0
        %575 = vadd.xlane.f32.xlu0 %v574
        %v576 = vpop.xlane.xlu0 %575
        %v577 = vrcp.pop %v576
        %v578 = vmul.f32 %v573, %v577
        %v579 = vpack.c.bf16 %v578, %v578
        %580 = vrot.lane.b32.xlu0 %v491, 56
        %v581 = vpop.permute.xlu0 %580
        %v583 = vsel %vm476, %v579, 0
        %v586 = vsel %vm497, %v581, 0
        %588 = vmatpush.bf16.msra.mxu0 0
        %589 = vmatpush.bf16.msra.mxu0 0
        %590 = vmatpush.bf16.msra.mxu0 0
        %591 = vmatpush.bf16.msra.mxu0 0
        %592 = vmatpush.bf16.msra.mxu0 0
        %593 = vmatpush.bf16.msra.mxu0 0
        %594 = vmatpush.bf16.msra.mxu0 0
        %595 = vmatpush.bf16.msra.mxu0 %v586
        %596 = vmatmul.bf16.gmra.mxu0 %v583
        %v597 = vpop.f32.mrf.mxu0
        %v598 = vadd.f32 0.0, %v597
        %v599 = vpop.f32.mrf.mxu0
        %600 = vdwg.mxu0
        %602 = vrot.lane.b32.xlu0 %v598, 8
        %v603 = vpop.permute.xlu0 %602
        %vm605 = vcmask 130112
        %606 = vst.msk [vmem:[#allocation2] sm:$0xff] %vm605, %v603
        %607 = vrot.lane.b32.xlu0 %v517, 120
        %v608 = vpop.permute.xlu0 %607
        %609 = vrot.lane.b32.xlu0 %v428, 88
        %v610 = vpop.permute.xlu0 %609
        %v612 = vsel %vm431, %v608, 0
        %v615 = vsel %vm431, %v610, 0
        %617 = vmatpush.bf16.xpose.msra.mxu0 0
        %618 = vmatpush.bf16.xpose.msra.mxu0 0
        %619 = vmatpush.bf16.xpose.msra.mxu0 0
        %620 = vmatpush.bf16.xpose.msra.mxu0 0
        %621 = vmatpush.bf16.xpose.msra.mxu0 0
        %622 = vmatpush.bf16.xpose.msra.mxu0 0
        %623 = vmatpush.bf16.xpose.msra.mxu0 0
        %624 = vmatpush.bf16.xpose.msra.mxu0 %v615
        %625 = vmatmul.bf16.gmra.mxu0 %v612
        %v626 = vpop.f32.mrf.mxu0
        %v627 = vadd.f32 0.0, %v626
        %v628 = vpop.f32.mrf.mxu0
        %629 = vdwg.mxu0
        %630 = vrot.lane.b32.xlu0 %v543, 120
        %v631 = vpop.permute.xlu0 %630
        %632 = vrot.lane.b32.xlu0 %v453, 88
        %v633 = vpop.permute.xlu0 %632
        %v635 = vsel %vm431, %v631, 0
        %v638 = vsel %vm431, %v633, 0
        %640 = vmatpush.bf16.xpose.msra.mxu0 0
        %641 = vmatpush.bf16.xpose.msra.mxu0 0
        %642 = vmatpush.bf16.xpose.msra.mxu0 0
        %643 = vmatpush.bf16.xpose.msra.mxu0 0
        %644 = vmatpush.bf16.xpose.msra.mxu0 0
        %645 = vmatpush.bf16.xpose.msra.mxu0 0
        %646 = vmatpush.bf16.xpose.msra.mxu0 0
        %647 = vmatpush.bf16.xpose.msra.mxu0 %v638
        %648 = vmatmul.bf16.gmra.mxu0 %v635
        %v649 = vpop.f32.mrf.mxu0
        %v650 = vadd.f32 %v627, %v649
        %v651 = vpop.f32.mrf.mxu0
        %652 = vdwg.mxu0
        %v653 = vsel %vm425, %v650, -1e+30
        %v654 = vsel %vm476, %v653, -inf
        %655 = vmax.xlane.f32.xlu0 %v654
        %v656 = vpop.xlane.xlu0 %655
        %v657 = vsub.f32 %v653, %v656
        %v658 = vmul.f32 %v657, 1.442695
        %v659 = vpow.pop %v658
        %v660 = vsel %vm476, %v659, 0.0
        %661 = vadd.xlane.f32.xlu0 %v660
        %v662 = vpop.xlane.xlu0 %661
        %v663 = vrcp.pop %v662
        %v664 = vmul.f32 %v659, %v663
        %v665 = vpack.c.bf16 %v664, %v664
        %666 = vrot.lane.b32.xlu0 %v491, 48
        %v667 = vpop.permute.xlu0 %666
        %v669 = vsel %vm476, %v665, 0
        %v672 = vsel %vm497, %v667, 0
        %674 = vmatpush.bf16.msra.mxu0 0
        %675 = vmatpush.bf16.msra.mxu0 0
        %676 = vmatpush.bf16.msra.mxu0 0
        %677 = vmatpush.bf16.msra.mxu0 0
        %678 = vmatpush.bf16.msra.mxu0 0
        %679 = vmatpush.bf16.msra.mxu0 0
        %680 = vmatpush.bf16.msra.mxu0 0
        %681 = vmatpush.bf16.msra.mxu0 %v672
        %682 = vmatmul.bf16.gmra.mxu0 %v669
        %v683 = vpop.f32.mrf.mxu0
        %v684 = vadd.f32 0.0, %v683
        %v685 = vpop.f32.mrf.mxu0
        %686 = vdwg.mxu0
        %688 = vrot.lane.b32.xlu0 %v684, 16
        %v689 = vpop.permute.xlu0 %688
        %vm691 = vcmask 195712
        %692 = vst.msk [vmem:[#allocation2] sm:$0xff] %vm691, %v689
        %693 = vrot.lane.b32.xlu0 %v517, 116
        %v694 = vpop.permute.xlu0 %693
        %695 = vrot.lane.b32.xlu0 %v428, 84
        %v696 = vpop.permute.xlu0 %695
        %v698 = vsel %vm431, %v694, 0
        %v701 = vsel %vm431, %v696, 0
        %703 = vmatpush.bf16.xpose.msra.mxu0 0
        %704 = vmatpush.bf16.xpose.msra.mxu0 0
        %705 = vmatpush.bf16.xpose.msra.mxu0 0
        %706 = vmatpush.bf16.xpose.msra.mxu0 0
        %707 = vmatpush.bf16.xpose.msra.mxu0 0
        %708 = vmatpush.bf16.xpose.msra.mxu0 0
        %709 = vmatpush.bf16.xpose.msra.mxu0 0
        %710 = vmatpush.bf16.xpose.msra.mxu0 %v701
        %711 = vmatmul.bf16.gmra.mxu0 %v698
        %v712 = vpop.f32.mrf.mxu0
        %v713 = vadd.f32 0.0, %v712
        %v714 = vpop.f32.mrf.mxu0
        %715 = vdwg.mxu0
        %716 = vrot.lane.b32.xlu0 %v543, 116
        %v717 = vpop.permute.xlu0 %716
        %718 = vrot.lane.b32.xlu0 %v453, 84
        %v719 = vpop.permute.xlu0 %718
        %v721 = vsel %vm431, %v717, 0
        %v724 = vsel %vm431, %v719, 0
        %726 = vmatpush.bf16.xpose.msra.mxu0 0
        %727 = vmatpush.bf16.xpose.msra.mxu0 0
        %728 = vmatpush.bf16.xpose.msra.mxu0 0
        %729 = vmatpush.bf16.xpose.msra.mxu0 0
        %730 = vmatpush.bf16.xpose.msra.mxu0 0
        %731 = vmatpush.bf16.xpose.msra.mxu0 0
        %732 = vmatpush.bf16.xpose.msra.mxu0 0
        %733 = vmatpush.bf16.xpose.msra.mxu0 %v724
        %734 = vmatmul.bf16.gmra.mxu0 %v721
        %v735 = vpop.f32.mrf.mxu0
        %v736 = vadd.f32 %v713, %v735
        %v737 = vpop.f32.mrf.mxu0
        %738 = vdwg.mxu0
        %v739 = vsel %vm425, %v736, -1e+30
        %v740 = vsel %vm476, %v739, -inf
        %741 = vmax.xlane.f32.xlu0 %v740
        %v742 = vpop.xlane.xlu0 %741
        %v743 = vsub.f32 %v739, %v742
        %v744 = vmul.f32 %v743, 1.442695
        %v745 = vpow.pop %v744
        %v746 = vsel %vm476, %v745, 0.0
        %747 = vadd.xlane.f32.xlu0 %v746
        %v748 = vpop.xlane.xlu0 %747
        %v749 = vrcp.pop %v748
        %v750 = vmul.f32 %v745, %v749
        %v751 = vpack.c.bf16 %v750, %v750
        %752 = vrot.lane.b32.xlu0 %v491, 40
        %v753 = vpop.permute.xlu0 %752
        %v755 = vsel %vm476, %v751, 0
        %v758 = vsel %vm497, %v753, 0
        %760 = vmatpush.bf16.msra.mxu0 0
        %761 = vmatpush.bf16.msra.mxu0 0
        %762 = vmatpush.bf16.msra.mxu0 0
        %763 = vmatpush.bf16.msra.mxu0 0
        %764 = vmatpush.bf16.msra.mxu0 0
        %765 = vmatpush.bf16.msra.mxu0 0
        %766 = vmatpush.bf16.msra.mxu0 0
        %767 = vmatpush.bf16.msra.mxu0 %v758
        %768 = vmatmul.bf16.gmra.mxu0 %v755
        %v769 = vpop.f32.mrf.mxu0
        %v770 = vadd.f32 0.0, %v769
        %v771 = vpop.f32.mrf.mxu0
        %772 = vdwg.mxu0
        %774 = vrot.lane.b32.xlu0 %v770, 24
        %v775 = vpop.permute.xlu0 %774
        %vm777 = vcmask 261312
        %778 = vst.msk [vmem:[#allocation2] sm:$0xff] %vm777, %v775
        %v779 = vld [vmem:[#allocation2] sm:$0xff]
        %v780 = vpack.c.bf16 %v779, %v779
        %v781 = vld [vmem:[#allocation8] sm:$0xf]
        %v782 = vld [vmem:[#allocation8 + $0x4] sm:$0xf]
        %v783 = vld [vmem:[#allocation8 + $0x8] sm:$0xf]
        %v784 = vld [vmem:[#allocation8 + $0xc] sm:$0xf]
        %v785 = vld [vmem:[%s3] sm:$0x1]
        %v787 = vperm.slane %v785, 0
        %v793 = vunpack.c.l.b16 %v781
        %v794 = vunpack.c.l.b16 %v782
        %v795 = vunpack.c.l.b16 %v783
        %v796 = vunpack.c.l.b16 %v784
        %v797 = vpack.c.b16 %v794, %v793
        %v798 = vpack.c.b16 %v796, %v795
        %v802 = vsel %vm349, %v780, 0
        %804 = vmatpush.bf16.msra.mxu0 0
        %805 = vmatpush.bf16.msra.mxu0 0
        %806 = vmatpush.bf16.msra.mxu0 0
        %807 = vmatpush.bf16.msra.mxu0 0
        %808 = vmatpush.bf16.msra.mxu0 0
        %809 = vmatpush.bf16.msra.mxu0 0
        %810 = vmatpush.bf16.msra.mxu0 %v798
        %811 = vmatpush.bf16.msra.mxu0 %v797
        %812 = vmatmul.bf16.gmra.mxu0 %v802
        %v813 = vpop.f32.mrf.mxu0
        %v814 = vadd.f32 %v787, %v813
        %v815 = vpop.f32.mrf.mxu0
        %816 = vdwg.mxu0
        %817 = vst.msk [vmem:[%s330] sm:$0xff] %vm349, %v814
        %s818 = sand.u32 %s164, 1
        %s819 = scalar_lea.sflag [#allocation5], %s818
        %s820 = sand.u32 %s164, 1
        %s821 = smul.addr %s820, 8
        %s822 = scalar_lea.vmem [#allocation12], %s821
        // Predicated region
        $region65: #{tpu_custom_call.1} parent=43 // pred_check
          %p823 = pneg %p174
        $region66: #{tpu_custom_call.1} parent=43 // pred_check_branch
          %825 = sbr.rel (%p823) target = $region68
        $region67: #{tpu_custom_call.1} parent=43 // pred_region
          %827 = vsyncadd %s819, 0
          %s828 = smul.addr %s25, 8
          %s829 = scalar_lea.hbm %s6, %s828
          %s831 = sshll.u32 %s822, 4
          %s832 = int_to_ptr.vmem [resolvable:$true] %s831
          %s833 = sshll.u32 %s829, 4
          %s834 = int_to_ptr.hbm [resolvable:$true] %s833
          %836 = dma.vmem_to_hbm [thread:$0]  %s832, 128, %s834, %s819
        $region68: #{tpu_custom_call.1} parent=43 // pred_fallthru
          _
      $region44: #{tpu_custom_call.1} parent=5 // pred_fallthru
        _
      %p837 = scmp.le.s32.totalorder 2, %s20
      // Predicated region
      $region69: #{tpu_custom_call.1} parent=5 // pred_check
        %p838 = pneg %p837
      $region70: #{tpu_custom_call.1} parent=5 // pred_check_branch
        %840 = sbr.rel (%p838) target = $region72
      $region71: #{tpu_custom_call.1} parent=5 // pred_region
        %s841 = ssub.s32 %s20, 2
        // Predicated region
        $region73: #{tpu_custom_call.1} parent=71 // pred_check
          %p842 = pneg %p180
        $region74: #{tpu_custom_call.1} parent=71 // pred_check_branch
          %844 = sbr.rel (%p842) target = $region76
        $region75: #{tpu_custom_call.1} parent=71 // pred_region
          %s845 = sand.u32 %s165, 1
          %s846 = scalar_lea.sflag [#allocation5], %s845
          %s847 = sand.u32 %s165, 1
          %s848 = smul.addr %s847, 8
          %s849 = scalar_lea.vmem [#allocation12], %s848
          %851 = dma.done %s846, 128
        $region76: #{tpu_custom_call.1} parent=71 // pred_fallthru
          _
      $region72: #{tpu_custom_call.1} parent=5 // pred_fallthru
        _
    $region6: #{tpu_custom_call.1} parent=1 // loop_footer
      %s24 = sadd.s32 1, %s20
    $region7: #{tpu_custom_call.1} parent=1 // loop_footer_branch
      %19 = sbr.rel target = $region3
    $region8: #{tpu_custom_call.1} parent=1 // loop_exit
      _
    %852 = vsyncpa [#allocation4], 1
    %s853 = scalar_lea.sflag [#allocation4], 1
    %854 = vsyncpa %s853, 1
    %855 = vsyncpa [#allocation7], 1
    %856 = vsyncpa [#allocation10], 1
    %857 = vsyncpa [#allocation5], 1
    %s858 = scalar_lea.sflag [#allocation5], 1
    %859 = vsyncpa %s858, 1

</llo_original>
